<compile_context>
chip_gen: v7x
topology: tpu7x:2x2x1
jax: 0.10.0
libtpu: 0.0.40
codegen_flags: <defaults>
</compile_context>

<pallas_src>
import functools

import jax
import jax.numpy as jnp
from jax import lax
from jax.experimental import pallas as pl
from jax.experimental.pallas import tpu as pltpu


# ----------------------------- fused Pallas kernel ---------------------------

def fused_multiconv_kernel(x_ref, ei_row_ref, ei_col_ref, ef_ref,
                           et_w1_ref, et_b1_ref, et_w2_ref, et_b2_ref,
                           *rest, num_layers, C, K, N, E2, lambda_max, mxu_dtype):
    layer_refs = rest[:2 * num_layers]
    o_ref = rest[2 * num_layers]
    f32 = jnp.float32

    def mm(a, b):
        # Optional bf16 cast of MXU operands (v6e/v7x); accumulate in f32.
        if mxu_dtype is not None:
            a = a.astype(mxu_dtype)
            b = b.astype(mxu_dtype)
        return jnp.dot(a, b, preferred_element_type=f32)

    # --- edge_trans residual MLP: ef = ef + Lin2(ReLU(Lin1(ef))) -------------
    ef0 = ef_ref[0]                                                    # [E2, C]
    h = jnp.maximum(mm(ef0, et_w1_ref[...]) + et_b1_ref[...], 0.0)
    ef = ef0 + mm(h, et_w2_ref[...]) + et_b2_ref[...]                  # [E2, C]

    # --- incidence built in-kernel from int32 edge_index (iota compares) -----
    eir = ei_row_ref[0]                                                # [2, E2] int32
    eic = ei_col_ref[0]                                                # [E2, 2] int32
    iota_ne = lax.broadcasted_iota(jnp.int32, (N, E2), 0)
    iota_en = lax.broadcasted_iota(jnp.int32, (E2, N), 1)
    s_srcT = (eir[0:1, :] == iota_ne).astype(f32)                      # [N, E2]
    s_dstT = (eir[1:2, :] == iota_ne).astype(f32)                      # [N, E2]
    s_src = (eic[:, 0:1] == iota_en).astype(f32)                       # [E2, N]

    scale = 2.0 / lambda_max
    # src-based degree (matches PyG get_laplacian row-scatter): [N, C]
    deg = mm(s_srcT, ef)
    # Dense per-channel Aᵀ only (no eye_n, no dense L): A_cᵀ[i,j] = w_{j->i,c}
    a_t = [mm(s_dstT, ef[:, c:c + 1] * s_src) for c in range(C)]       # C x [N, N]

    def lhat(c, t):
        # L_hat_c @ t = (2/λ)(deg_c ⊙ t - A_cᵀ @ t) - t ; diagonal folded in.
        return scale * (deg[:, c:c + 1] * t - mm(a_t[c], t)) - t

    # --- Chebyshev conv stack (layers / orders / channels unrolled) ----------
    x = x_ref[0]                                                       # [N, F_in0]
    for li in range(num_layers):
        w_ref = layer_refs[2 * li]       # [F_in + (K-1)*C*F_in, F_out] (wrapper-packed)
        b_ref = layer_refs[2 * li + 1]   # [1, F_out]  (pre-summed over channels)

        blocks = [x]                     # T0 shared across channels; W pre-summed
        if K > 1:
            t_prev = [x] * C
            t_cur = [lhat(c, x) for c in range(C)]
            blocks += t_cur
            for _k in range(2, K):
                t_nxt = [2.0 * lhat(c, t_cur[c]) - t_prev[c] for c in range(C)]
                blocks += t_nxt
                t_prev, t_cur = t_cur, t_nxt

        # Single lane-concatenate of naturally laid-out [N, F_in] blocks, then
        # ONE wide dot (contraction dim F_in + (K-1)*C*F_in).
        t_wide = blocks[0] if len(blocks) == 1 else jnp.concatenate(blocks, axis=1)
        x = mm(t_wide, w_ref[...]) + b_ref[...]
        if li < num_layers - 1:
            # TODO(synk): nn.Dropout treated as identity (inference / eval mode).
            x = jnp.maximum(x, 0.0)

    o_ref[0] = x.astype(o_ref.dtype)


# ------------------------------ wrapper ---------------------------------------

def multi_conv_net_forward(params, data_x, edge_index, edge_attr, *,
                           dim_featn, dim_feate, K, lambda_max=2.0,
                           mxu_dtype=None):
    """data_x: [B, N, 2*dim_featn+4], edge_index: [B, 2, E] int, edge_attr: [B, E, 5]."""
    B, N, fdim = data_x.shape
    assert fdim == dim_featn * 2 + 4
    C = dim_feate
    x = data_x[:, :, 4:4 + dim_featn].astype(jnp.float32)

    # undirect_graph: example graphs are directed, so reversed edges are appended
    # (matching the PyTorch branch taken for directed input).
    # TODO(synk): is_directed() is a data-dependent branch; not traced dynamically.
    ei_full = jnp.concatenate([edge_index, edge_index[:, ::-1, :]], axis=2)  # [B,2,E2]
    ea_full = jnp.concatenate([edge_attr, edge_attr], axis=1)                # [B,E2,5]
    ef = ea_full[:, :, :C].astype(jnp.float32)                               # [B,E2,C]
    ei_row = ei_full.astype(jnp.int32)                                       # [B,2,E2]
    ei_col = jnp.transpose(ei_full, (0, 2, 1)).astype(jnp.int32)             # [B,E2,2]
    E2 = ei_row.shape[2]

    # Pack per-layer weights for the single wide dot (wrapper-side layout is free):
    # t_wide columns are [T0 | k=1: c=0..C-1 | k=2: c=0..C-1 | ...]; T0 weight
    # blocks pre-summed over channels; biases pre-summed over channels.
    layer_args, layer_dims = [], []
    for (w, b) in params["layers"]:
        c_, k_, f_in, f_out = w.shape
        parts = [w[:, 0].sum(axis=0)]                                        # [F_in, F_out]
        if k_ > 1:
            parts.append(jnp.transpose(w[:, 1:], (1, 0, 2, 3))
                         .reshape((k_ - 1) * c_ * f_in, f_out))
        layer_args.append(jnp.concatenate(parts, axis=0))
        layer_args.append(b.sum(axis=0))                                     # [1, F_out]
        layer_dims.append((f_in, f_out))

    num_layers = len(params["layers"])
    dim_out = layer_dims[-1][1]
    H = params["et_w1"].shape[1]

    # Advisory cost estimate (whole batch).
    fl = 4 * E2 * C * H + 2 * E2 * N * C + C * 2 * E2 * N * N
    for f_in, f_out in layer_dims:
        fl += (K - 1) * C * (2 * N * N * f_in + 4 * N * f_in)                # propagation
        fl += 2 * N * (f_in + (K - 1) * C * f_in) * f_out                    # wide output dot
    flops = B * fl

    weight_arrays = [params["et_w1"], params["et_b1"],
                     params["et_w2"], params["et_b2"], *layer_args]
    inputs = [x, ei_row, ei_col, ef, *weight_arrays]
    bytes_accessed = (sum(int(a.size) * a.dtype.itemsize for a in inputs)
                      + B * N * dim_out * 4)

    in_specs = [
        pl.BlockSpec((1, N, dim_featn), lambda b: (b, 0, 0)),
        pl.BlockSpec((1, 2, E2), lambda b: (b, 0, 0)),
        pl.BlockSpec((1, E2, 2), lambda b: (b, 0, 0)),
        pl.BlockSpec((1, E2, C), lambda b: (b, 0, 0)),
    ] + [pl.BlockSpec(wa.shape, lambda b: (0, 0)) for wa in weight_arrays]

    kern = functools.partial(fused_multiconv_kernel, num_layers=num_layers,
                             C=C, K=K, N=N, E2=E2, lambda_max=lambda_max,
                             mxu_dtype=mxu_dtype)
    return pl.pallas_call(
        kern,
        out_shape=jax.ShapeDtypeStruct((B, N, dim_out), jnp.float32),
        grid=(B,),
        in_specs=in_specs,
        out_specs=pl.BlockSpec((1, N, dim_out), lambda b: (b, 0, 0)),
        compiler_params=pltpu.CompilerParams(
            dimension_semantics=("parallel",),       # shards batch across TCs on v7x
            vmem_limit_bytes=32 * 1024 * 1024,       # explicit budget; working set is tiny
        ),
        cost_estimate=pl.CostEstimate(flops=int(flops), transcendentals=0,
                                      bytes_accessed=int(bytes_accessed)),
    )(*inputs)


# ------------------------------ params ----------------------------------------

def glorot(key, shape):
    fan_in, fan_out = shape[-2], shape[-1]
    limit = (6.0 / (fan_in + fan_out)) ** 0.5
    return jax.random.uniform(key, shape, jnp.float32, -limit, limit)


def init_params(key, dim_featn, dim_feate, dim_out, dim_hid, n_gnn_layers, K):
    keys = jax.random.split(key, 4 + 2 * n_gnn_layers)
    params = {
        "et_w1": glorot(keys[0], (dim_feate, dim_hid)),
        "et_b1": jnp.zeros((1, dim_hid), jnp.float32),
        "et_w2": glorot(keys[1], (dim_hid, dim_feate)),
        "et_b2": jnp.zeros((1, dim_feate), jnp.float32),
    }
    if n_gnn_layers == 1:
        dims = [(dim_featn, dim_out)]
    else:
        dims = [(dim_featn, dim_hid)]
        dims += [(dim_hid, dim_hid)] * (n_gnn_layers - 2)
        dims += [(dim_hid, dim_out)]
    layers = []
    for li, (f_in, f_out) in enumerate(dims):
        w = glorot(keys[4 + li], (dim_feate, K, f_in, f_out))
        b = jnp.zeros((dim_feate, 1, f_out), jnp.float32)
        layers.append((w, b))
    params["layers"] = layers
    return params


# ------------------------------ main -------------------------------------------

if __name__ == "__main__":
    dim_featn = 4
    dim_feate_raw = 5          # asserted == 5 in the module; reduced to 2 inside
    dim_out = 3
    dim_hid = 32
    n_gnn_layers = 2
    K = 3
    dim_feate = dim_feate_raw - 3

    B, N, E = 8, 16, 16        # batch of graphs -> grid axis (parallel)
    key = jax.random.PRNGKey(0)
    kx, ke, kp = jax.random.split(key, 3)

    data_x = jax.random.normal(kx, (B, N, dim_featn * 2 + 4), jnp.float32)
    edge_attr = jax.random.normal(ke, (B, E, dim_feate_raw), jnp.float32)
    src = jnp.arange(E, dtype=jnp.int32)
    dst = (src + 1) % N
    edge_index = jnp.broadcast_to(jnp.stack([src, dst])[None], (B, 2, E)).astype(jnp.int32)

    params = init_params(kp, dim_featn, dim_feate, dim_out, dim_hid,
                         n_gnn_layers, K)

    # TODO(synk): lambda_max hardcoded to 2.0 (PyG would require it explicitly for
    # normalization=None); set mxu_dtype=jnp.bfloat16 on v6e/v7x for 2x MXU peak.
    fwd = jax.jit(functools.partial(multi_conv_net_forward,
                                    dim_featn=dim_featn,
                                    dim_feate=dim_feate,
                                    K=K))
    out = jax.block_until_ready(fwd(params, data_x, edge_index, edge_attr))
    assert out.shape == (B, N, dim_out), out.shape
    print("KERNEL_OK")
</pallas_src>

<mosaic_0001>
module attributes {stable_mosaic.version = 11 : i64} {
  func.func @fused_multiconv_kernel(%arg0: i32, %arg1: memref<1x16x4xf32, #tpu.memory_space<vmem>>, %arg2: memref<1x2x32xi32, #tpu.memory_space<vmem>>, %arg3: memref<1x32x2xi32, #tpu.memory_space<vmem>>, %arg4: memref<1x32x2xf32, #tpu.memory_space<vmem>>, %arg5: memref<2x32xf32, #tpu.memory_space<vmem>>, %arg6: memref<1x32xf32, #tpu.memory_space<vmem>>, %arg7: memref<32x2xf32, #tpu.memory_space<vmem>>, %arg8: memref<1x2xf32, #tpu.memory_space<vmem>>, %arg9: memref<20x32xf32, #tpu.memory_space<vmem>>, %arg10: memref<1x32xf32, #tpu.memory_space<vmem>>, %arg11: memref<160x3xf32, #tpu.memory_space<vmem>>, %arg12: memref<1x3xf32, #tpu.memory_space<vmem>>, %arg13: memref<1x16x3xf32, #tpu.memory_space<vmem>>) attributes {dimension_semantics = [#tpu.dimension_semantics<parallel>], iteration_bounds = array<i64: 8>, scalar_prefetch = 0 : i64, scratch_operands = 0 : i64, tpu.core_type = #tpu.core_type<tc>, window_params = [{transform_indices = @transform_0, window_bounds = array<i64: 1, 16, 4>}, {transform_indices = @transform_1, window_bounds = array<i64: 1, 2, 32>}, {transform_indices = @transform_2, window_bounds = array<i64: 1, 32, 2>}, {transform_indices = @transform_3, window_bounds = array<i64: 1, 32, 2>}, {pipeline_mode = #tpu.pipeline_mode<synchronous>, transform_indices = @transform_4, window_bounds = array<i64: 2, 32>}, {pipeline_mode = #tpu.pipeline_mode<synchronous>, transform_indices = @transform_5, window_bounds = array<i64: 1, 32>}, {pipeline_mode = #tpu.pipeline_mode<synchronous>, transform_indices = @transform_6, window_bounds = array<i64: 32, 2>}, {pipeline_mode = #tpu.pipeline_mode<synchronous>, transform_indices = @transform_7, window_bounds = array<i64: 1, 2>}, {pipeline_mode = #tpu.pipeline_mode<synchronous>, transform_indices = @transform_8, window_bounds = array<i64: 20, 32>}, {pipeline_mode = #tpu.pipeline_mode<synchronous>, transform_indices = @transform_9, window_bounds = array<i64: 1, 32>}, {pipeline_mode = #tpu.pipeline_mode<synchronous>, transform_indices = @transform_10, window_bounds = array<i64: 160, 3>}, {pipeline_mode = #tpu.pipeline_mode<synchronous>, transform_indices = @transform_11, window_bounds = array<i64: 1, 3>}, {transform_indices = @transform_12, window_bounds = array<i64: 1, 16, 3>}]} {
    %c0 = arith.constant 0 : index
    %c0_0 = arith.constant 0 : index
    %c0_1 = arith.constant 0 : index
    %0 = vector.load %arg4[%c0, %c0_0, %c0_1] : memref<1x32x2xf32, #tpu.memory_space<vmem>>, vector<1x32x2xf32>
    %1 = vector.shape_cast %0 : vector<1x32x2xf32> to vector<32x2xf32>
    %c0_2 = arith.constant 0 : index
    %c0_3 = arith.constant 0 : index
    %2 = vector.load %arg5[%c0_2, %c0_3] : memref<2x32xf32, #tpu.memory_space<vmem>>, vector<2x32xf32>
    %cst = arith.constant dense<0.000000e+00> : vector<32x32xf32>
    %3 = tpu.matmul %1, %2, %cst {dimension_numbers = #tpu.dot_dimension_numbers<[1], [0], [0], [1], [0, 0, 1, 1], [], []>} : vector<32x2xf32>, vector<2x32xf32>, vector<32x32xf32> -> vector<32x32xf32>
    %c0_4 = arith.constant 0 : index
    %c0_5 = arith.constant 0 : index
    %4 = vector.load %arg6[%c0_4, %c0_5] : memref<1x32xf32, #tpu.memory_space<vmem>>, vector<1x32xf32>
    %5 = vector.broadcast %4 : vector<1x32xf32> to vector<32x32xf32>
    %6 = arith.addf %3, %5 : vector<32x32xf32>
    %cst_6 = arith.constant 0.000000e+00 : f32
    %7 = vector.broadcast %cst_6 : f32 to vector<32x32xf32>
    %8 = arith.maximumf %6, %7 : vector<32x32xf32>
    %c0_7 = arith.constant 0 : index
    %c0_8 = arith.constant 0 : index
    %9 = vector.load %arg7[%c0_7, %c0_8] : memref<32x2xf32, #tpu.memory_space<vmem>>, vector<32x2xf32>
    %cst_9 = arith.constant dense<0.000000e+00> : vector<32x2xf32>
    %10 = tpu.matmul %8, %9, %cst_9 {dimension_numbers = #tpu.dot_dimension_numbers<[1], [0], [0], [1], [0, 0, 1, 1], [], []>} : vector<32x32xf32>, vector<32x2xf32>, vector<32x2xf32> -> vector<32x2xf32>
    %11 = arith.addf %1, %10 : vector<32x2xf32>
    %c0_10 = arith.constant 0 : index
    %c0_11 = arith.constant 0 : index
    %12 = vector.load %arg8[%c0_10, %c0_11] : memref<1x2xf32, #tpu.memory_space<vmem>>, vector<1x2xf32>
    %13 = vector.broadcast %12 : vector<1x2xf32> to vector<32x2xf32>
    %14 = arith.addf %11, %13 : vector<32x2xf32>
    %c0_12 = arith.constant 0 : index
    %c0_13 = arith.constant 0 : index
    %c0_14 = arith.constant 0 : index
    %15 = vector.load %arg2[%c0_12, %c0_13, %c0_14] : memref<1x2x32xi32, #tpu.memory_space<vmem>>, vector<1x2x32xi32>
    %16 = vector.shape_cast %15 : vector<1x2x32xi32> to vector<2x32xi32>
    %c0_15 = arith.constant 0 : index
    %c0_16 = arith.constant 0 : index
    %c0_17 = arith.constant 0 : index
    %17 = vector.load %arg3[%c0_15, %c0_16, %c0_17] : memref<1x32x2xi32, #tpu.memory_space<vmem>>, vector<1x32x2xi32>
    %18 = vector.shape_cast %17 : vector<1x32x2xi32> to vector<32x2xi32>
    %19 = tpu.iota {dimensions = array<i32: 0>} : vector<16x32xi32>
    %20 = tpu.iota {dimensions = array<i32: 1>} : vector<32x16xi32>
    %21 = vector.extract_strided_slice %16 {offsets = [0, 0], sizes = [1, 32], strides = [1, 1]} : vector<2x32xi32> to vector<1x32xi32>
    %22 = vector.broadcast %21 : vector<1x32xi32> to vector<16x32xi32>
    %23 = arith.cmpi eq, %22, %19 : vector<16x32xi32>
    %24 = arith.extui %23 : vector<16x32xi1> to vector<16x32xi32>
    %25 = arith.sitofp %24 : vector<16x32xi32> to vector<16x32xf32>
    %26 = vector.extract_strided_slice %16 {offsets = [1, 0], sizes = [1, 32], strides = [1, 1]} : vector<2x32xi32> to vector<1x32xi32>
    %27 = vector.broadcast %26 : vector<1x32xi32> to vector<16x32xi32>
    %28 = arith.cmpi eq, %27, %19 : vector<16x32xi32>
    %29 = arith.extui %28 : vector<16x32xi1> to vector<16x32xi32>
    %30 = arith.sitofp %29 : vector<16x32xi32> to vector<16x32xf32>
    %31 = vector.extract_strided_slice %18 {offsets = [0, 0], sizes = [32, 1], strides = [1, 1]} : vector<32x2xi32> to vector<32x1xi32>
    %32 = vector.broadcast %31 : vector<32x1xi32> to vector<32x16xi32>
    %33 = arith.cmpi eq, %32, %20 : vector<32x16xi32>
    %34 = arith.extui %33 : vector<32x16xi1> to vector<32x16xi32>
    %35 = arith.sitofp %34 : vector<32x16xi32> to vector<32x16xf32>
    %cst_18 = arith.constant dense<0.000000e+00> : vector<16x2xf32>
    %36 = tpu.matmul %25, %14, %cst_18 {dimension_numbers = #tpu.dot_dimension_numbers<[1], [0], [0], [1], [0, 0, 1, 1], [], []>} : vector<16x32xf32>, vector<32x2xf32>, vector<16x2xf32> -> vector<16x2xf32>
    %37 = vector.extract_strided_slice %14 {offsets = [0, 0], sizes = [32, 1], strides = [1, 1]} : vector<32x2xf32> to vector<32x1xf32>
    %38 = vector.broadcast %37 : vector<32x1xf32> to vector<32x16xf32>
    %39 = arith.mulf %38, %35 : vector<32x16xf32>
    %cst_19 = arith.constant dense<0.000000e+00> : vector<16x16xf32>
    %40 = tpu.matmul %30, %39, %cst_19 {dimension_numbers = #tpu.dot_dimension_numbers<[1], [0], [0], [1], [0, 0, 1, 1], [], []>} : vector<16x32xf32>, vector<32x16xf32>, vector<16x16xf32> -> vector<16x16xf32>
    %41 = vector.extract_strided_slice %14 {offsets = [0, 1], sizes = [32, 1], strides = [1, 1]} : vector<32x2xf32> to vector<32x1xf32>
    %42 = vector.broadcast %41 : vector<32x1xf32> to vector<32x16xf32>
    %43 = arith.mulf %42, %35 : vector<32x16xf32>
    %cst_20 = arith.constant dense<0.000000e+00> : vector<16x16xf32>
    %44 = tpu.matmul %30, %43, %cst_20 {dimension_numbers = #tpu.dot_dimension_numbers<[1], [0], [0], [1], [0, 0, 1, 1], [], []>} : vector<16x32xf32>, vector<32x16xf32>, vector<16x16xf32> -> vector<16x16xf32>
    %c0_21 = arith.constant 0 : index
    %c0_22 = arith.constant 0 : index
    %c0_23 = arith.constant 0 : index
    %45 = vector.load %arg1[%c0_21, %c0_22, %c0_23] : memref<1x16x4xf32, #tpu.memory_space<vmem>>, vector<1x16x4xf32>
    %46 = vector.shape_cast %45 : vector<1x16x4xf32> to vector<16x4xf32>
    %47 = vector.extract_strided_slice %36 {offsets = [0, 0], sizes = [16, 1], strides = [1, 1]} : vector<16x2xf32> to vector<16x1xf32>
    %48 = vector.broadcast %47 : vector<16x1xf32> to vector<16x4xf32>
    %49 = arith.mulf %48, %46 : vector<16x4xf32>
    %cst_24 = arith.constant dense<0.000000e+00> : vector<16x4xf32>
    %50 = tpu.matmul %40, %46, %cst_24 {dimension_numbers = #tpu.dot_dimension_numbers<[1], [0], [0], [1], [0, 0, 1, 1], [], []>} : vector<16x16xf32>, vector<16x4xf32>, vector<16x4xf32> -> vector<16x4xf32>
    %51 = arith.subf %49, %50 : vector<16x4xf32>
    %cst_25 = arith.constant 1.000000e+00 : f32
    %52 = vector.broadcast %cst_25 : f32 to vector<16x4xf32>
    %53 = arith.mulf %52, %51 : vector<16x4xf32>
    %54 = arith.subf %53, %46 : vector<16x4xf32>
    %55 = vector.extract_strided_slice %36 {offsets = [0, 1], sizes = [16, 1], strides = [1, 1]} : vector<16x2xf32> to vector<16x1xf32>
    %56 = vector.broadcast %55 : vector<16x1xf32> to vector<16x4xf32>
    %57 = arith.mulf %56, %46 : vector<16x4xf32>
    %cst_26 = arith.constant dense<0.000000e+00> : vector<16x4xf32>
    %58 = tpu.matmul %44, %46, %cst_26 {dimension_numbers = #tpu.dot_dimension_numbers<[1], [0], [0], [1], [0, 0, 1, 1], [], []>} : vector<16x16xf32>, vector<16x4xf32>, vector<16x4xf32> -> vector<16x4xf32>
    %59 = arith.subf %57, %58 : vector<16x4xf32>
    %cst_27 = arith.constant 1.000000e+00 : f32
    %60 = vector.broadcast %cst_27 : f32 to vector<16x4xf32>
    %61 = arith.mulf %60, %59 : vector<16x4xf32>
    %62 = arith.subf %61, %46 : vector<16x4xf32>
    %63 = vector.extract_strided_slice %36 {offsets = [0, 0], sizes = [16, 1], strides = [1, 1]} : vector<16x2xf32> to vector<16x1xf32>
    %64 = vector.broadcast %63 : vector<16x1xf32> to vector<16x4xf32>
    %65 = arith.mulf %64, %54 : vector<16x4xf32>
    %cst_28 = arith.constant dense<0.000000e+00> : vector<16x4xf32>
    %66 = tpu.matmul %40, %54, %cst_28 {dimension_numbers = #tpu.dot_dimension_numbers<[1], [0], [0], [1], [0, 0, 1, 1], [], []>} : vector<16x16xf32>, vector<16x4xf32>, vector<16x4xf32> -> vector<16x4xf32>
    %67 = arith.subf %65, %66 : vector<16x4xf32>
    %cst_29 = arith.constant 1.000000e+00 : f32
    %68 = vector.broadcast %cst_29 : f32 to vector<16x4xf32>
    %69 = arith.mulf %68, %67 : vector<16x4xf32>
    %70 = arith.subf %69, %54 : vector<16x4xf32>
    %cst_30 = arith.constant 2.000000e+00 : f32
    %71 = vector.broadcast %cst_30 : f32 to vector<16x4xf32>
    %72 = arith.mulf %71, %70 : vector<16x4xf32>
    %73 = arith.subf %72, %46 : vector<16x4xf32>
    %74 = vector.extract_strided_slice %36 {offsets = [0, 1], sizes = [16, 1], strides = [1, 1]} : vector<16x2xf32> to vector<16x1xf32>
    %75 = vector.broadcast %74 : vector<16x1xf32> to vector<16x4xf32>
    %76 = arith.mulf %75, %62 : vector<16x4xf32>
    %cst_31 = arith.constant dense<0.000000e+00> : vector<16x4xf32>
    %77 = tpu.matmul %44, %62, %cst_31 {dimension_numbers = #tpu.dot_dimension_numbers<[1], [0], [0], [1], [0, 0, 1, 1], [], []>} : vector<16x16xf32>, vector<16x4xf32>, vector<16x4xf32> -> vector<16x4xf32>
    %78 = arith.subf %76, %77 : vector<16x4xf32>
    %cst_32 = arith.constant 1.000000e+00 : f32
    %79 = vector.broadcast %cst_32 : f32 to vector<16x4xf32>
    %80 = arith.mulf %79, %78 : vector<16x4xf32>
    %81 = arith.subf %80, %62 : vector<16x4xf32>
    %cst_33 = arith.constant 2.000000e+00 : f32
    %82 = vector.broadcast %cst_33 : f32 to vector<16x4xf32>
    %83 = arith.mulf %82, %81 : vector<16x4xf32>
    %84 = arith.subf %83, %46 : vector<16x4xf32>
    %85 = tpu.concatenate %46, %54, %62, %73, %84 in 1 : vector<16x4xf32>, vector<16x4xf32>, vector<16x4xf32>, vector<16x4xf32>, vector<16x4xf32> -> vector<16x20xf32>
    %c0_34 = arith.constant 0 : index
    %c0_35 = arith.constant 0 : index
    %86 = vector.load %arg9[%c0_34, %c0_35] : memref<20x32xf32, #tpu.memory_space<vmem>>, vector<20x32xf32>
    %cst_36 = arith.constant dense<0.000000e+00> : vector<16x32xf32>
    %87 = tpu.matmul %85, %86, %cst_36 {dimension_numbers = #tpu.dot_dimension_numbers<[1], [0], [0], [1], [0, 0, 1, 1], [], []>} : vector<16x20xf32>, vector<20x32xf32>, vector<16x32xf32> -> vector<16x32xf32>
    %c0_37 = arith.constant 0 : index
    %c0_38 = arith.constant 0 : index
    %88 = vector.load %arg10[%c0_37, %c0_38] : memref<1x32xf32, #tpu.memory_space<vmem>>, vector<1x32xf32>
    %89 = vector.broadcast %88 : vector<1x32xf32> to vector<16x32xf32>
    %90 = arith.addf %87, %89 : vector<16x32xf32>
    %cst_39 = arith.constant 0.000000e+00 : f32
    %91 = vector.broadcast %cst_39 : f32 to vector<16x32xf32>
    %92 = arith.maximumf %90, %91 : vector<16x32xf32>
    %93 = vector.extract_strided_slice %36 {offsets = [0, 0], sizes = [16, 1], strides = [1, 1]} : vector<16x2xf32> to vector<16x1xf32>
    %94 = vector.broadcast %93 : vector<16x1xf32> to vector<16x32xf32>
    %95 = arith.mulf %94, %92 : vector<16x32xf32>
    %cst_40 = arith.constant dense<0.000000e+00> : vector<16x32xf32>
    %96 = tpu.matmul %40, %92, %cst_40 {dimension_numbers = #tpu.dot_dimension_numbers<[1], [0], [0], [1], [0, 0, 1, 1], [], []>} : vector<16x16xf32>, vector<16x32xf32>, vector<16x32xf32> -> vector<16x32xf32>
    %97 = arith.subf %95, %96 : vector<16x32xf32>
    %cst_41 = arith.constant 1.000000e+00 : f32
    %98 = vector.broadcast %cst_41 : f32 to vector<16x32xf32>
    %99 = arith.mulf %98, %97 : vector<16x32xf32>
    %100 = arith.subf %99, %92 : vector<16x32xf32>
    %101 = vector.extract_strided_slice %36 {offsets = [0, 1], sizes = [16, 1], strides = [1, 1]} : vector<16x2xf32> to vector<16x1xf32>
    %102 = vector.broadcast %101 : vector<16x1xf32> to vector<16x32xf32>
    %103 = arith.mulf %102, %92 : vector<16x32xf32>
    %cst_42 = arith.constant dense<0.000000e+00> : vector<16x32xf32>
    %104 = tpu.matmul %44, %92, %cst_42 {dimension_numbers = #tpu.dot_dimension_numbers<[1], [0], [0], [1], [0, 0, 1, 1], [], []>} : vector<16x16xf32>, vector<16x32xf32>, vector<16x32xf32> -> vector<16x32xf32>
    %105 = arith.subf %103, %104 : vector<16x32xf32>
    %cst_43 = arith.constant 1.000000e+00 : f32
    %106 = vector.broadcast %cst_43 : f32 to vector<16x32xf32>
    %107 = arith.mulf %106, %105 : vector<16x32xf32>
    %108 = arith.subf %107, %92 : vector<16x32xf32>
    %109 = vector.extract_strided_slice %36 {offsets = [0, 0], sizes = [16, 1], strides = [1, 1]} : vector<16x2xf32> to vector<16x1xf32>
    %110 = vector.broadcast %109 : vector<16x1xf32> to vector<16x32xf32>
    %111 = arith.mulf %110, %100 : vector<16x32xf32>
    %cst_44 = arith.constant dense<0.000000e+00> : vector<16x32xf32>
    %112 = tpu.matmul %40, %100, %cst_44 {dimension_numbers = #tpu.dot_dimension_numbers<[1], [0], [0], [1], [0, 0, 1, 1], [], []>} : vector<16x16xf32>, vector<16x32xf32>, vector<16x32xf32> -> vector<16x32xf32>
    %113 = arith.subf %111, %112 : vector<16x32xf32>
    %cst_45 = arith.constant 1.000000e+00 : f32
    %114 = vector.broadcast %cst_45 : f32 to vector<16x32xf32>
    %115 = arith.mulf %114, %113 : vector<16x32xf32>
    %116 = arith.subf %115, %100 : vector<16x32xf32>
    %cst_46 = arith.constant 2.000000e+00 : f32
    %117 = vector.broadcast %cst_46 : f32 to vector<16x32xf32>
    %118 = arith.mulf %117, %116 : vector<16x32xf32>
    %119 = arith.subf %118, %92 : vector<16x32xf32>
    %120 = vector.extract_strided_slice %36 {offsets = [0, 1], sizes = [16, 1], strides = [1, 1]} : vector<16x2xf32> to vector<16x1xf32>
    %121 = vector.broadcast %120 : vector<16x1xf32> to vector<16x32xf32>
    %122 = arith.mulf %121, %108 : vector<16x32xf32>
    %cst_47 = arith.constant dense<0.000000e+00> : vector<16x32xf32>
    %123 = tpu.matmul %44, %108, %cst_47 {dimension_numbers = #tpu.dot_dimension_numbers<[1], [0], [0], [1], [0, 0, 1, 1], [], []>} : vector<16x16xf32>, vector<16x32xf32>, vector<16x32xf32> -> vector<16x32xf32>
    %124 = arith.subf %122, %123 : vector<16x32xf32>
    %cst_48 = arith.constant 1.000000e+00 : f32
    %125 = vector.broadcast %cst_48 : f32 to vector<16x32xf32>
    %126 = arith.mulf %125, %124 : vector<16x32xf32>
    %127 = arith.subf %126, %108 : vector<16x32xf32>
    %cst_49 = arith.constant 2.000000e+00 : f32
    %128 = vector.broadcast %cst_49 : f32 to vector<16x32xf32>
    %129 = arith.mulf %128, %127 : vector<16x32xf32>
    %130 = arith.subf %129, %92 : vector<16x32xf32>
    %131 = tpu.concatenate %92, %100, %108, %119, %130 in 1 : vector<16x32xf32>, vector<16x32xf32>, vector<16x32xf32>, vector<16x32xf32>, vector<16x32xf32> -> vector<16x160xf32>
    %c0_50 = arith.constant 0 : index
    %c0_51 = arith.constant 0 : index
    %132 = vector.load %arg11[%c0_50, %c0_51] : memref<160x3xf32, #tpu.memory_space<vmem>>, vector<160x3xf32>
    %cst_52 = arith.constant dense<0.000000e+00> : vector<16x3xf32>
    %133 = tpu.matmul %131, %132, %cst_52 {dimension_numbers = #tpu.dot_dimension_numbers<[1], [0], [0], [1], [0, 0, 1, 1], [], []>} : vector<16x160xf32>, vector<160x3xf32>, vector<16x3xf32> -> vector<16x3xf32>
    %c0_53 = arith.constant 0 : index
    %c0_54 = arith.constant 0 : index
    %134 = vector.load %arg12[%c0_53, %c0_54] : memref<1x3xf32, #tpu.memory_space<vmem>>, vector<1x3xf32>
    %135 = vector.broadcast %134 : vector<1x3xf32> to vector<16x3xf32>
    %136 = arith.addf %133, %135 : vector<16x3xf32>
    %c0_55 = arith.constant 0 : index
    %c0_56 = arith.constant 0 : index
    %c0_57 = arith.constant 0 : index
    %137 = vector.load %arg13[%c0_55, %c0_56, %c0_57] : memref<1x16x3xf32, #tpu.memory_space<vmem>>, vector<1x16x3xf32>
    %138 = vector.shape_cast %137 : vector<1x16x3xf32> to vector<16x3xf32>
    %139 = vector.shape_cast %136 : vector<16x3xf32> to vector<1x16x3xf32>
    tpu.vector_store %arg13[%c0_55, %c0_56, %c0_57], %139 {strides = array<i32>} : memref<1x16x3xf32, #tpu.memory_space<vmem>>, vector<1x16x3xf32>,
    return
  }
  func.func @transform_0(%arg0: i32) -> (i32, i32, i32) {
    %c0_i32 = arith.constant 0 : i32
    %c0_i32_0 = arith.constant 0 : i32
    %c0_i32_1 = arith.constant 0 : i32
    return %arg0, %c0_i32, %c0_i32_0 : i32, i32, i32
  }
  func.func @transform_1(%arg0: i32) -> (i32, i32, i32) {
    %c0_i32 = arith.constant 0 : i32
    %c0_i32_0 = arith.constant 0 : i32
    %c0_i32_1 = arith.constant 0 : i32
    return %arg0, %c0_i32, %c0_i32_0 : i32, i32, i32
  }
  func.func @transform_2(%arg0: i32) -> (i32, i32, i32) {
    %c0_i32 = arith.constant 0 : i32
    %c0_i32_0 = arith.constant 0 : i32
    %c0_i32_1 = arith.constant 0 : i32
    return %arg0, %c0_i32, %c0_i32_0 : i32, i32, i32
  }
  func.func @transform_3(%arg0: i32) -> (i32, i32, i32) {
    %c0_i32 = arith.constant 0 : i32
    %c0_i32_0 = arith.constant 0 : i32
    %c0_i32_1 = arith.constant 0 : i32
    return %arg0, %c0_i32, %c0_i32_0 : i32, i32, i32
  }
  func.func @transform_4(%arg0: i32) -> (i32, i32) {
    %c0_i32 = arith.constant 0 : i32
    %c0_i32_0 = arith.constant 0 : i32
    %c0_i32_1 = arith.constant 0 : i32
    return %c0_i32, %c0_i32_0 : i32, i32
  }
  func.func @transform_5(%arg0: i32) -> (i32, i32) {
    %c0_i32 = arith.constant 0 : i32
    %c0_i32_0 = arith.constant 0 : i32
    %c0_i32_1 = arith.constant 0 : i32
    return %c0_i32, %c0_i32_0 : i32, i32
  }
  func.func @transform_6(%arg0: i32) -> (i32, i32) {
    %c0_i32 = arith.constant 0 : i32
    %c0_i32_0 = arith.constant 0 : i32
    %c0_i32_1 = arith.constant 0 : i32
    return %c0_i32, %c0_i32_0 : i32, i32
  }
  func.func @transform_7(%arg0: i32) -> (i32, i32) {
    %c0_i32 = arith.constant 0 : i32
    %c0_i32_0 = arith.constant 0 : i32
    %c0_i32_1 = arith.constant 0 : i32
    return %c0_i32, %c0_i32_0 : i32, i32
  }
  func.func @transform_8(%arg0: i32) -> (i32, i32) {
    %c0_i32 = arith.constant 0 : i32
    %c0_i32_0 = arith.constant 0 : i32
    %c0_i32_1 = arith.constant 0 : i32
    return %c0_i32, %c0_i32_0 : i32, i32
  }
  func.func @transform_9(%arg0: i32) -> (i32, i32) {
    %c0_i32 = arith.constant 0 : i32
    %c0_i32_0 = arith.constant 0 : i32
    %c0_i32_1 = arith.constant 0 : i32
    return %c0_i32, %c0_i32_0 : i32, i32
  }
  func.func @transform_10(%arg0: i32) -> (i32, i32) {
    %c0_i32 = arith.constant 0 : i32
    %c0_i32_0 = arith.constant 0 : i32
    %c0_i32_1 = arith.constant 0 : i32
    return %c0_i32, %c0_i32_0 : i32, i32
  }
  func.func @transform_11(%arg0: i32) -> (i32, i32) {
    %c0_i32 = arith.constant 0 : i32
    %c0_i32_0 = arith.constant 0 : i32
    %c0_i32_1 = arith.constant 0 : i32
    return %c0_i32, %c0_i32_0 : i32, i32
  }
  func.func @transform_12(%arg0: i32) -> (i32, i32, i32) {
    %c0_i32 = arith.constant 0 : i32
    %c0_i32_0 = arith.constant 0 : i32
    %c0_i32_1 = arith.constant 0 : i32
    return %arg0, %c0_i32, %c0_i32_0 : i32, i32, i32
  }
}

</mosaic_0001>

<llo_original>
// kernel: multi_conv_net_forward.1
$region0: #{multi_conv_net_forward.1}
  #allocation0 [shape = 'u32[]', space=smem, size = 0x4, offset = 0x4, fixed_abs, tag = 'smem constant byte address 0x4 - core index']
  #allocation1 [shape = 'u32[144,128]{1,0:T(1,128)}', space=vmem, size = 0x12000, scoped, tag = 'internal scratch']
  %s0 = inlined_call_operand.vmem [shape: f32[8,16,4], index: 0, kind: input, shape index: {}]
  %s1 = inlined_call_operand.vmem [shape: s32[8,2,32], index: 1, kind: input, shape index: {}]
  %s2 = inlined_call_operand.vmem [shape: s32[8,32,2], index: 2, kind: input, shape index: {}]
  %s3 = inlined_call_operand.vmem [shape: f32[8,32,2], index: 3, kind: input, shape index: {}]
  %s4 = inlined_call_operand.vmem [shape: f32[2,32], index: 4, kind: input, shape index: {}]
  %s5 = inlined_call_operand.vmem [shape: f32[1,32], index: 5, kind: input, shape index: {}]
  %s6 = inlined_call_operand.vmem [shape: f32[32,2], index: 6, kind: input, shape index: {}]
  %s7 = inlined_call_operand.vmem [shape: f32[1,2], index: 7, kind: input, shape index: {}]
  %s8 = inlined_call_operand.vmem [shape: f32[20,32], index: 8, kind: input, shape index: {}]
  %s9 = inlined_call_operand.vmem [shape: f32[1,32], index: 9, kind: input, shape index: {}]
  %s10 = inlined_call_operand.vmem [shape: f32[160,3], index: 10, kind: input, shape index: {}]
  %s11 = inlined_call_operand.vmem [shape: f32[1,3], index: 11, kind: input, shape index: {}]
  %s12 = inlined_call_operand.vmem [shape: f32[8,16,3], index: 12, kind: output, shape index: {}]
  %s13 = sld [smem:[#allocation0]]
  $region81: #{multi_conv_net_forward.1} parent=0
    _
  %s15 = ssub.s32 1, %s13
  %s16 = scalar_select 0, %s15, %s13
  loop: start=0, step=1, limit=10
  $region2: #{multi_conv_net_forward.1} parent=0 // loop_pre_header
    _
  $region3: #{multi_conv_net_forward.1} parent=0 // loop_header
    %s18 = sphi 0, %s22
    %p19 = scmp.ge.s32.totalorder %s18, 10
    %s28 = sphi 0, %s30
    %s31 = sphi 0, %s28
    %s32 = sphi 0, %s31
    %s48 = sphi 0, %s32
    %s54 = sphi 0, %s56
    %s57 = sphi 0, %s54
    %s58 = sphi 0, %s57
    %s74 = sphi 0, %s58
    %s80 = sphi 0, %s82
    %s83 = sphi 0, %s80
    %s84 = sphi 0, %s83
    %s100 = sphi 0, %s84
    %s106 = sphi 0, %s108
    %s109 = sphi 0, %s106
    %s110 = sphi 0, %s109
    %s126 = sphi 0, %s110
    %s130 = sphi 0, %s130
    %s132 = sphi 0, %s130
    %s133 = sphi 0, %s132
    %s147 = sphi 0, %s133
    %s151 = sphi 0, %s151
    %s153 = sphi 0, %s151
    %s154 = sphi 0, %s153
    %s168 = sphi 0, %s154
    %s172 = sphi 0, %s172
    %s174 = sphi 0, %s172
    %s175 = sphi 0, %s174
    %s189 = sphi 0, %s175
    %s193 = sphi 0, %s193
    %s195 = sphi 0, %s193
    %s196 = sphi 0, %s195
    %s210 = sphi 0, %s196
    %s214 = sphi 0, %s214
    %s216 = sphi 0, %s214
    %s217 = sphi 0, %s216
    %s231 = sphi 0, %s217
    %s235 = sphi 0, %s235
    %s237 = sphi 0, %s235
    %s238 = sphi 0, %s237
    %s252 = sphi 0, %s238
    %s256 = sphi 0, %s256
    %s258 = sphi 0, %s256
    %s259 = sphi 0, %s258
    %s273 = sphi 0, %s259
    %s277 = sphi 0, %s277
    %s279 = sphi 0, %s277
    %s280 = sphi 0, %s279
    %s294 = sphi 0, %s280
    %s300 = sphi 0, %s302
    %s303 = sphi 0, %s300
    %s304 = sphi 0, %s303
    %s320 = sphi 0, %s304
  $region4: #{multi_conv_net_forward.1} parent=0 // loop_header_branch
    %21 = sbr.rel (%p19) target = $region8
  $region5: #{multi_conv_net_forward.1} parent=0 // loop_body
    %s23 = ssub.s32 %s18, 1
    %s24 = ssub.s32 %s18, 2
    %s25 = sadd.s32 %s18, 1
    %s26 = ssub.s32 %s18, %s25
    %p27 = scmp.eq.s32.totalorder %s26, 0
    %s29 = sadd.s32 %s28, 1
    %s30 = scalar_select %p27, %s28, %s29
    %p33 = pneg %p27
    %p34 = scmp.eq.s32.totalorder %s18, 7
    %p35 = por %p33, %p34
    %p36 = scmp.ne.s32.totalorder %s28, %s31
    %p37 = scmp.eq.s32.totalorder %s18, 0
    %p38 = por %p36, %p37
    %p39 = scmp.ne.s32.totalorder %s28, %s31
    %p40 = scmp.eq.s32.totalorder %s23, 7
    %p41 = por %p39, %p40
    %p42 = scmp.ne.s32.totalorder %s31, %s32
    %p43 = scmp.eq.s32.totalorder %s23, 0
    %p44 = por %p42, %p43
    %p45 = scmp.ne.s32.totalorder %s31, %s32
    %p46 = scmp.eq.s32.totalorder %s24, 7
    %p47 = por %p45, %p46
    %p49 = scmp.ne.s32.totalorder %s32, %s48
    %p50 = scmp.eq.s32.totalorder %s24, 0
    %p51 = por %p49, %p50
    %s52 = ssub.s32 %s18, %s25
    %p53 = scmp.eq.s32.totalorder %s52, 0
    %s55 = sadd.s32 %s54, 1
    %s56 = scalar_select %p53, %s54, %s55
    %p59 = pneg %p53
    %p60 = scmp.eq.s32.totalorder %s18, 7
    %p61 = por %p59, %p60
    %p62 = scmp.ne.s32.totalorder %s54, %s57
    %p63 = scmp.eq.s32.totalorder %s18, 0
    %p64 = por %p62, %p63
    %p65 = scmp.ne.s32.totalorder %s54, %s57
    %p66 = scmp.eq.s32.totalorder %s23, 7
    %p67 = por %p65, %p66
    %p68 = scmp.ne.s32.totalorder %s57, %s58
    %p69 = scmp.eq.s32.totalorder %s23, 0
    %p70 = por %p68, %p69
    %p71 = scmp.ne.s32.totalorder %s57, %s58
    %p72 = scmp.eq.s32.totalorder %s24, 7
    %p73 = por %p71, %p72
    %p75 = scmp.ne.s32.totalorder %s58, %s74
    %p76 = scmp.eq.s32.totalorder %s24, 0
    %p77 = por %p75, %p76
    %s78 = ssub.s32 %s18, %s25
    %p79 = scmp.eq.s32.totalorder %s78, 0
    %s81 = sadd.s32 %s80, 1
    %s82 = scalar_select %p79, %s80, %s81
    %p85 = pneg %p79
    %p86 = scmp.eq.s32.totalorder %s18, 7
    %p87 = por %p85, %p86
    %p88 = scmp.ne.s32.totalorder %s80, %s83
    %p89 = scmp.eq.s32.totalorder %s18, 0
    %p90 = por %p88, %p89
    %p91 = scmp.ne.s32.totalorder %s80, %s83
    %p92 = scmp.eq.s32.totalorder %s23, 7
    %p93 = por %p91, %p92
    %p94 = scmp.ne.s32.totalorder %s83, %s84
    %p95 = scmp.eq.s32.totalorder %s23, 0
    %p96 = por %p94, %p95
    %p97 = scmp.ne.s32.totalorder %s83, %s84
    %p98 = scmp.eq.s32.totalorder %s24, 7
    %p99 = por %p97, %p98
    %p101 = scmp.ne.s32.totalorder %s84, %s100
    %p102 = scmp.eq.s32.totalorder %s24, 0
    %p103 = por %p101, %p102
    %s104 = ssub.s32 %s18, %s25
    %p105 = scmp.eq.s32.totalorder %s104, 0
    %s107 = sadd.s32 %s106, 1
    %s108 = scalar_select %p105, %s106, %s107
    %p111 = pneg %p105
    %p112 = scmp.eq.s32.totalorder %s18, 7
    %p113 = por %p111, %p112
    %p114 = scmp.ne.s32.totalorder %s106, %s109
    %p115 = scmp.eq.s32.totalorder %s18, 0
    %p116 = por %p114, %p115
    %p117 = scmp.ne.s32.totalorder %s106, %s109
    %p118 = scmp.eq.s32.totalorder %s23, 7
    %p119 = por %p117, %p118
    %p120 = scmp.ne.s32.totalorder %s109, %s110
    %p121 = scmp.eq.s32.totalorder %s23, 0
    %p122 = por %p120, %p121
    %p123 = scmp.ne.s32.totalorder %s109, %s110
    %p124 = scmp.eq.s32.totalorder %s24, 7
    %p125 = por %p123, %p124
    %p127 = scmp.ne.s32.totalorder %s110, %s126
    %p128 = scmp.eq.s32.totalorder %s24, 0
    %p129 = por %p127, %p128
    %s131 = sadd.s32 %s130, 1
    %p134 = scmp.eq.s32.totalorder %s18, 7
    %p135 = scmp.ne.s32.totalorder %s130, %s132
    %p136 = scmp.eq.s32.totalorder %s18, 0
    %p137 = por %p135, %p136
    %p138 = scmp.ne.s32.totalorder %s130, %s132
    %p139 = scmp.eq.s32.totalorder %s23, 7
    %p140 = por %p138, %p139
    %p141 = scmp.ne.s32.totalorder %s132, %s133
    %p142 = scmp.eq.s32.totalorder %s23, 0
    %p143 = por %p141, %p142
    %p144 = scmp.ne.s32.totalorder %s132, %s133
    %p145 = scmp.eq.s32.totalorder %s24, 7
    %p146 = por %p144, %p145
    %p148 = scmp.ne.s32.totalorder %s133, %s147
    %p149 = scmp.eq.s32.totalorder %s24, 0
    %p150 = por %p148, %p149
    %s152 = sadd.s32 %s151, 1
    %p155 = scmp.eq.s32.totalorder %s18, 7
    %p156 = scmp.ne.s32.totalorder %s151, %s153
    %p157 = scmp.eq.s32.totalorder %s18, 0
    %p158 = por %p156, %p157
    %p159 = scmp.ne.s32.totalorder %s151, %s153
    %p160 = scmp.eq.s32.totalorder %s23, 7
    %p161 = por %p159, %p160
    %p162 = scmp.ne.s32.totalorder %s153, %s154
    %p163 = scmp.eq.s32.totalorder %s23, 0
    %p164 = por %p162, %p163
    %p165 = scmp.ne.s32.totalorder %s153, %s154
    %p166 = scmp.eq.s32.totalorder %s24, 7
    %p167 = por %p165, %p166
    %p169 = scmp.ne.s32.totalorder %s154, %s168
    %p170 = scmp.eq.s32.totalorder %s24, 0
    %p171 = por %p169, %p170
    %s173 = sadd.s32 %s172, 1
    %p176 = scmp.eq.s32.totalorder %s18, 7
    %p177 = scmp.ne.s32.totalorder %s172, %s174
    %p178 = scmp.eq.s32.totalorder %s18, 0
    %p179 = por %p177, %p178
    %p180 = scmp.ne.s32.totalorder %s172, %s174
    %p181 = scmp.eq.s32.totalorder %s23, 7
    %p182 = por %p180, %p181
    %p183 = scmp.ne.s32.totalorder %s174, %s175
    %p184 = scmp.eq.s32.totalorder %s23, 0
    %p185 = por %p183, %p184
    %p186 = scmp.ne.s32.totalorder %s174, %s175
    %p187 = scmp.eq.s32.totalorder %s24, 7
    %p188 = por %p186, %p187
    %p190 = scmp.ne.s32.totalorder %s175, %s189
    %p191 = scmp.eq.s32.totalorder %s24, 0
    %p192 = por %p190, %p191
    %s194 = sadd.s32 %s193, 1
    %p197 = scmp.eq.s32.totalorder %s18, 7
    %p198 = scmp.ne.s32.totalorder %s193, %s195
    %p199 = scmp.eq.s32.totalorder %s18, 0
    %p200 = por %p198, %p199
    %p201 = scmp.ne.s32.totalorder %s193, %s195
    %p202 = scmp.eq.s32.totalorder %s23, 7
    %p203 = por %p201, %p202
    %p204 = scmp.ne.s32.totalorder %s195, %s196
    %p205 = scmp.eq.s32.totalorder %s23, 0
    %p206 = por %p204, %p205
    %p207 = scmp.ne.s32.totalorder %s195, %s196
    %p208 = scmp.eq.s32.totalorder %s24, 7
    %p209 = por %p207, %p208
    %p211 = scmp.ne.s32.totalorder %s196, %s210
    %p212 = scmp.eq.s32.totalorder %s24, 0
    %p213 = por %p211, %p212
    %s215 = sadd.s32 %s214, 1
    %p218 = scmp.eq.s32.totalorder %s18, 7
    %p219 = scmp.ne.s32.totalorder %s214, %s216
    %p220 = scmp.eq.s32.totalorder %s18, 0
    %p221 = por %p219, %p220
    %p222 = scmp.ne.s32.totalorder %s214, %s216
    %p223 = scmp.eq.s32.totalorder %s23, 7
    %p224 = por %p222, %p223
    %p225 = scmp.ne.s32.totalorder %s216, %s217
    %p226 = scmp.eq.s32.totalorder %s23, 0
    %p227 = por %p225, %p226
    %p228 = scmp.ne.s32.totalorder %s216, %s217
    %p229 = scmp.eq.s32.totalorder %s24, 7
    %p230 = por %p228, %p229
    %p232 = scmp.ne.s32.totalorder %s217, %s231
    %p233 = scmp.eq.s32.totalorder %s24, 0
    %p234 = por %p232, %p233
    %s236 = sadd.s32 %s235, 1
    %p239 = scmp.eq.s32.totalorder %s18, 7
    %p240 = scmp.ne.s32.totalorder %s235, %s237
    %p241 = scmp.eq.s32.totalorder %s18, 0
    %p242 = por %p240, %p241
    %p243 = scmp.ne.s32.totalorder %s235, %s237
    %p244 = scmp.eq.s32.totalorder %s23, 7
    %p245 = por %p243, %p244
    %p246 = scmp.ne.s32.totalorder %s237, %s238
    %p247 = scmp.eq.s32.totalorder %s23, 0
    %p248 = por %p246, %p247
    %p249 = scmp.ne.s32.totalorder %s237, %s238
    %p250 = scmp.eq.s32.totalorder %s24, 7
    %p251 = por %p249, %p250
    %p253 = scmp.ne.s32.totalorder %s238, %s252
    %p254 = scmp.eq.s32.totalorder %s24, 0
    %p255 = por %p253, %p254
    %s257 = sadd.s32 %s256, 1
    %p260 = scmp.eq.s32.totalorder %s18, 7
    %p261 = scmp.ne.s32.totalorder %s256, %s258
    %p262 = scmp.eq.s32.totalorder %s18, 0
    %p263 = por %p261, %p262
    %p264 = scmp.ne.s32.totalorder %s256, %s258
    %p265 = scmp.eq.s32.totalorder %s23, 7
    %p266 = por %p264, %p265
    %p267 = scmp.ne.s32.totalorder %s258, %s259
    %p268 = scmp.eq.s32.totalorder %s23, 0
    %p269 = por %p267, %p268
    %p270 = scmp.ne.s32.totalorder %s258, %s259
    %p271 = scmp.eq.s32.totalorder %s24, 7
    %p272 = por %p270, %p271
    %p274 = scmp.ne.s32.totalorder %s259, %s273
    %p275 = scmp.eq.s32.totalorder %s24, 0
    %p276 = por %p274, %p275
    %s278 = sadd.s32 %s277, 1
    %p281 = scmp.eq.s32.totalorder %s18, 7
    %p282 = scmp.ne.s32.totalorder %s277, %s279
    %p283 = scmp.eq.s32.totalorder %s18, 0
    %p284 = por %p282, %p283
    %p285 = scmp.ne.s32.totalorder %s277, %s279
    %p286 = scmp.eq.s32.totalorder %s23, 7
    %p287 = por %p285, %p286
    %p288 = scmp.ne.s32.totalorder %s279, %s280
    %p289 = scmp.eq.s32.totalorder %s23, 0
    %p290 = por %p288, %p289
    %p291 = scmp.ne.s32.totalorder %s279, %s280
    %p292 = scmp.eq.s32.totalorder %s24, 7
    %p293 = por %p291, %p292
    %p295 = scmp.ne.s32.totalorder %s280, %s294
    %p296 = scmp.eq.s32.totalorder %s24, 0
    %p297 = por %p295, %p296
    %s298 = ssub.s32 %s18, %s25
    %p299 = scmp.eq.s32.totalorder %s298, 0
    %s301 = sadd.s32 %s300, 1
    %s302 = scalar_select %p299, %s300, %s301
    %p305 = pneg %p299
    %p306 = scmp.eq.s32.totalorder %s18, 7
    %p307 = por %p305, %p306
    %p308 = scmp.ne.s32.totalorder %s300, %s303
    %p309 = scmp.eq.s32.totalorder %s18, 0
    %p310 = por %p308, %p309
    %p311 = scmp.ne.s32.totalorder %s300, %s303
    %p312 = scmp.eq.s32.totalorder %s23, 7
    %p313 = por %p311, %p312
    %p314 = scmp.ne.s32.totalorder %s303, %s304
    %p315 = scmp.eq.s32.totalorder %s23, 0
    %p316 = por %p314, %p315
    %p317 = scmp.ne.s32.totalorder %s303, %s304
    %p318 = scmp.eq.s32.totalorder %s24, 7
    %p319 = por %p317, %p318
    %p321 = scmp.ne.s32.totalorder %s304, %s320
    %p322 = scmp.eq.s32.totalorder %s24, 0
    %p323 = por %p321, %p322
    %p324 = scmp.le.s32.totalorder 1, %s18
    %p325 = scmp.lt.s32.totalorder %s18, 9
    %p326 = pnand %p324, %p325
    %p327 = pneg %p326
    // Predicated region
    $region9: #{multi_conv_net_forward.1} parent=5 // pred_check
      _
    $region10: #{multi_conv_net_forward.1} parent=5 // pred_check_branch
      %329 = sbr.rel (%p326) target = $region12
    $region11: #{multi_conv_net_forward.1} parent=5 // pred_region
      %s330 = ssub.s32 %s18, 1
      // Predicated region
      $region13: #{multi_conv_net_forward.1} parent=11 // pred_check
        %p331 = pneg %p143
      $region14: #{multi_conv_net_forward.1} parent=11 // pred_check_branch
        %333 = sbr.rel (%p331) target = $region16
      $region15: #{multi_conv_net_forward.1} parent=11 // pred_region
        _
      $region16: #{multi_conv_net_forward.1} parent=11 // pred_fallthru
        _
      // Predicated region
      $region17: #{multi_conv_net_forward.1} parent=11 // pred_check
        %p334 = pneg %p164
      $region18: #{multi_conv_net_forward.1} parent=11 // pred_check_branch
        %336 = sbr.rel (%p334) target = $region20
      $region19: #{multi_conv_net_forward.1} parent=11 // pred_region
        _
      $region20: #{multi_conv_net_forward.1} parent=11 // pred_fallthru
        _
      // Predicated region
      $region21: #{multi_conv_net_forward.1} parent=11 // pred_check
        %p337 = pneg %p185
      $region22: #{multi_conv_net_forward.1} parent=11 // pred_check_branch
        %339 = sbr.rel (%p337) target = $region24
      $region23: #{multi_conv_net_forward.1} parent=11 // pred_region
        _
      $region24: #{multi_conv_net_forward.1} parent=11 // pred_fallthru
        _
      // Predicated region
      $region25: #{multi_conv_net_forward.1} parent=11 // pred_check
        %p340 = pneg %p206
      $region26: #{multi_conv_net_forward.1} parent=11 // pred_check_branch
        %342 = sbr.rel (%p340) target = $region28
      $region27: #{multi_conv_net_forward.1} parent=11 // pred_region
        _
      $region28: #{multi_conv_net_forward.1} parent=11 // pred_fallthru
        _
      // Predicated region
      $region29: #{multi_conv_net_forward.1} parent=11 // pred_check
        %p343 = pneg %p227
      $region30: #{multi_conv_net_forward.1} parent=11 // pred_check_branch
        %345 = sbr.rel (%p343) target = $region32
      $region31: #{multi_conv_net_forward.1} parent=11 // pred_region
        _
      $region32: #{multi_conv_net_forward.1} parent=11 // pred_fallthru
        _
      // Predicated region
      $region33: #{multi_conv_net_forward.1} parent=11 // pred_check
        %p346 = pneg %p248
      $region34: #{multi_conv_net_forward.1} parent=11 // pred_check_branch
        %348 = sbr.rel (%p346) target = $region36
      $region35: #{multi_conv_net_forward.1} parent=11 // pred_region
        _
      $region36: #{multi_conv_net_forward.1} parent=11 // pred_fallthru
        _
      // Predicated region
      $region37: #{multi_conv_net_forward.1} parent=11 // pred_check
        %p349 = pneg %p269
      $region38: #{multi_conv_net_forward.1} parent=11 // pred_check_branch
        %351 = sbr.rel (%p349) target = $region40
      $region39: #{multi_conv_net_forward.1} parent=11 // pred_region
        _
      $region40: #{multi_conv_net_forward.1} parent=11 // pred_fallthru
        _
      // Predicated region
      $region41: #{multi_conv_net_forward.1} parent=11 // pred_check
        %p352 = pneg %p290
      $region42: #{multi_conv_net_forward.1} parent=11 // pred_check_branch
        %354 = sbr.rel (%p352) target = $region44
      $region43: #{multi_conv_net_forward.1} parent=11 // pred_region
        _
      $region44: #{multi_conv_net_forward.1} parent=11 // pred_fallthru
        _
    $region12: #{multi_conv_net_forward.1} parent=5 // pred_fallthru
      _
    %p355 = scmp.lt.s32.totalorder %s18, 8
    // Predicated region
    $region45: #{multi_conv_net_forward.1} parent=5 // pred_check
      %p356 = pneg %p355
    $region46: #{multi_conv_net_forward.1} parent=5 // pred_check_branch
      %358 = sbr.rel (%p356) target = $region48
    $region47: #{multi_conv_net_forward.1} parent=5 // pred_region
      // Predicated region
      $region49: #{multi_conv_net_forward.1} parent=47 // pred_check
        %p359 = pneg %p38
      $region50: #{multi_conv_net_forward.1} parent=47 // pred_check_branch
        %361 = sbr.rel (%p359) target = $region52
      $region51: #{multi_conv_net_forward.1} parent=47 // pred_region
        %p362 = scmp.lt.s32.totalorder %s18, 7
        %s363 = scalar_select %p362, %s18, 7
        %s364 = smul.addr %s363, 2
        %s365 = smul.addr %s364, 8
        %s366 = scalar_lea.vmem %s0, %s365
      $region52: #{multi_conv_net_forward.1} parent=47 // pred_fallthru
        _
      // Predicated region
      $region53: #{multi_conv_net_forward.1} parent=47 // pred_check
        %p367 = pneg %p64
      $region54: #{multi_conv_net_forward.1} parent=47 // pred_check_branch
        %369 = sbr.rel (%p367) target = $region56
      $region55: #{multi_conv_net_forward.1} parent=47 // pred_region
        %p370 = scmp.lt.s32.totalorder %s18, 7
        %s371 = scalar_select %p370, %s18, 7
        %s372 = smul.addr %s371, 2
        %s373 = scalar_lea.vmem %s1, %s372
      $region56: #{multi_conv_net_forward.1} parent=47 // pred_fallthru
        _
      // Predicated region
      $region57: #{multi_conv_net_forward.1} parent=47 // pred_check
        %p374 = pneg %p90
      $region58: #{multi_conv_net_forward.1} parent=47 // pred_check_branch
        %376 = sbr.rel (%p374) target = $region60
      $region59: #{multi_conv_net_forward.1} parent=47 // pred_region
        %p377 = scmp.lt.s32.totalorder %s18, 7
        %s378 = scalar_select %p377, %s18, 7
        %s379 = smul.addr %s378, 4
        %s380 = smul.addr %s379, 8
        %s381 = scalar_lea.vmem %s2, %s380
      $region60: #{multi_conv_net_forward.1} parent=47 // pred_fallthru
        _
      // Predicated region
      $region61: #{multi_conv_net_forward.1} parent=47 // pred_check
        %p382 = pneg %p116
      $region62: #{multi_conv_net_forward.1} parent=47 // pred_check_branch
        %384 = sbr.rel (%p382) target = $region64
      $region63: #{multi_conv_net_forward.1} parent=47 // pred_region
        %p385 = scmp.lt.s32.totalorder %s18, 7
        %s386 = scalar_select %p385, %s18, 7
        %s387 = smul.addr %s386, 4
        %s388 = smul.addr %s387, 8
        %s389 = scalar_lea.vmem %s3, %s388
      $region64: #{multi_conv_net_forward.1} parent=47 // pred_fallthru
        _
    $region48: #{multi_conv_net_forward.1} parent=5 // pred_fallthru
      _
    %p390 = scmp.le.s32.totalorder 1, %s18
    %p391 = scmp.lt.s32.totalorder %s18, 9
    %p392 = pnand %p390, %p391
    %p393 = pneg %p392
    // Predicated region
    $region65: #{multi_conv_net_forward.1} parent=5 // pred_check
      _
    $region66: #{multi_conv_net_forward.1} parent=5 // pred_check_branch
      %395 = sbr.rel (%p392) target = $region68
    $region67: #{multi_conv_net_forward.1} parent=5 // pred_region
      %s396 = ssub.s32 %s18, 1
      %p397 = scmp.lt.s32.totalorder %s23, 7
      %s398 = scalar_select %p397, %s23, 7
      %s399 = smul.addr %s398, 2
      %s400 = smul.addr %s399, 8
      %s401 = scalar_lea.vmem %s0, %s400
      %p402 = pneg %p44
      %p403 = pneg %p41
      %p404 = scmp.lt.s32.totalorder %s23, 7
      %s405 = scalar_select %p404, %s23, 7
      %s406 = smul.addr %s405, 2
      %s407 = scalar_lea.vmem %s1, %s406
      %p408 = pneg %p70
      %p409 = pneg %p67
      %p410 = scmp.lt.s32.totalorder %s23, 7
      %s411 = scalar_select %p410, %s23, 7
      %s412 = smul.addr %s411, 4
      %s413 = smul.addr %s412, 8
      %s414 = scalar_lea.vmem %s2, %s413
      %p415 = pneg %p96
      %p416 = pneg %p93
      %p417 = scmp.lt.s32.totalorder %s23, 7
      %s418 = scalar_select %p417, %s23, 7
      %s419 = smul.addr %s418, 4
      %s420 = smul.addr %s419, 8
      %s421 = scalar_lea.vmem %s3, %s420
      %p422 = pneg %p122
      %p423 = pneg %p119
      %p424 = pneg %p143
      %p425 = pneg %p140
      %p426 = pneg %p164
      %p427 = pneg %p161
      %p428 = pneg %p185
      %p429 = pneg %p182
      %p430 = pneg %p206
      %p431 = pneg %p203
      %p432 = pneg %p227
      %p433 = pneg %p224
      %p434 = pneg %p248
      %p435 = pneg %p245
      %p436 = pneg %p269
      %p437 = pneg %p266
      %p438 = pneg %p290
      %p439 = pneg %p287
      %p440 = pneg %p316
      %p441 = pneg %p313
      %p442 = scmp.lt.s32.totalorder %s23, 7
      %s443 = scalar_select %p442, %s23, 7
      %s444 = smul.addr %s443, 2
      %s445 = smul.addr %s444, 8
      %s446 = scalar_lea.vmem %s12, %s445
      %p447 = scmp.lt.s32.totalorder %s23, 7
      %s448 = scalar_select %p447, %s23, 7
      %s449 = smul.addr %s448, 2
      %s450 = smul.addr %s449, 8
      %s451 = scalar_lea.vmem %s0, %s450
      %p452 = scmp.lt.s32.totalorder %s23, 7
      %s453 = scalar_select %p452, %s23, 7
      %s454 = smul.addr %s453, 2
      %s455 = scalar_lea.vmem %s1, %s454
      %p456 = scmp.lt.s32.totalorder %s23, 7
      %s457 = scalar_select %p456, %s23, 7
      %s458 = smul.addr %s457, 4
      %s459 = smul.addr %s458, 8
      %s460 = scalar_lea.vmem %s2, %s459
      %p461 = scmp.lt.s32.totalorder %s23, 7
      %s462 = scalar_select %p461, %s23, 7
      %s463 = smul.addr %s462, 4
      %s464 = smul.addr %s463, 8
      %s465 = scalar_lea.vmem %s3, %s464
      %p466 = scmp.lt.s32.totalorder %s23, 7
      %s467 = scalar_select %p466, %s23, 7
      %s468 = smul.addr %s467, 2
      %s469 = smul.addr %s468, 8
      %s470 = scalar_lea.vmem %s12, %s469
      %v471 = vld [vmem:[%s465] sm:$0xff]
      %v472 = vld [vmem:[%s465 + $0x8] sm:$0xff]
      %v473 = vld [vmem:[%s465 + $0x10] sm:$0xff]
      %v474 = vld [vmem:[%s465 + $0x18] sm:$0xff]
      %v475 = vld [vmem:[%s4] sm:$0x3]
      %v476 = vld [vmem:[%s5] sm:$0x1]
      %v478 = vlaneseq
      %v479 = vshrl.u32 %v478, 7
      %v480 = vsub.s32 0, %v479
      %v481 = vrot.slane %v476, %v480
      %vm483 = vcmask 15360
      %v485 = vsel %vm483, %v471, 0
      %v488 = vsel %vm483, %v472, 0
      %v491 = vsel %vm483, %v473, 0
      %v494 = vsel %vm483, %v474, 0
      %vm496 = vcmask 1041408
      %v498 = vsel %vm496, %v475, 0
      %500 = vmatprep.subr.mxu0 0.0
      %501 = vmatpush1.msra.mxu0 %v498
      %502 = vmatprep.subr.mxu0 0.0
      %503 = vmatpush1.msra.mxu0 0.0
      %504 = vmatprep.subr.mxu0 0.0
      %505 = vmatpush1.msra.mxu0 0.0
      %506 = vmatprep.subr.mxu0 0.0
      %507 = vmatpush1.msra.mxu0 0.0
      %508 = vmatprep.subr.mxu0 0.0
      %509 = vmatpush1.msra.mxu0 0.0
      %510 = vmatprep.subr.mxu0 0.0
      %511 = vmatpush1.msra.mxu0 0.0
      %512 = vmatprep.subr.mxu0 0.0
      %513 = vmatpush1.msra.mxu0 0.0
      %514 = vmatprep.subr.mxu0 0.0
      %515 = vmatpush1.msra.mxu0 0.0
      %516 = vmatprep.subr.mxu0 0.0
      %517 = vmatpush1.msra.mxu0 0.0
      %518 = vmatprep.subr.mxu0 0.0
      %519 = vmatpush1.msra.mxu0 0.0
      %520 = vmatprep.subr.mxu0 0.0
      %521 = vmatpush1.msra.mxu0 0.0
      %522 = vmatprep.subr.mxu0 0.0
      %523 = vmatpush1.msra.mxu0 0.0
      %524 = vmatprep.subr.mxu0 0.0
      %525 = vmatpush1.msra.mxu0 0.0
      %526 = vmatprep.subr.mxu0 0.0
      %527 = vmatpush1.msra.mxu0 0.0
      %528 = vmatprep.subr.mxu0 0.0
      %529 = vmatpush1.msra.mxu0 0.0
      %530 = vmatprep.subr.mxu0 0.0
      %531 = vmatpush1.msra.mxu0 0.0
      %532 = vmatprep.subr.mxu0 0.0
      %533 = vmatpush1.msra.mxu0 0.0
      %534 = vmatprep.subr.mxu0 0.0
      %535 = vmatpush1.msra.mxu0 0.0
      %536 = vmatprep.subr.mxu0 0.0
      %537 = vmatpush1.msra.mxu0 0.0
      %538 = vmatprep.subr.mxu0 0.0
      %539 = vmatpush1.msra.mxu0 0.0
      %540 = vmatprep.subr.mxu0 0.0
      %541 = vmatpush1.msra.mxu0 0.0
      %542 = vmatprep.subr.mxu0 0.0
      %543 = vmatpush1.msra.mxu0 0.0
      %544 = vmatprep.subr.mxu0 0.0
      %545 = vmatpush1.msra.mxu0 0.0
      %546 = vmatprep.subr.mxu0 0.0
      %547 = vmatpush1.msra.mxu0 0.0
      %548 = vmatprep.subr.mxu0 0.0
      %549 = vmatpush1.msra.mxu0 0.0
      %550 = vmatprep.subr.mxu0 0.0
      %551 = vmatpush1.msra.mxu0 0.0
      %552 = vmatprep.subr.mxu0 0.0
      %553 = vmatpush1.msra.mxu0 0.0
      %554 = vmatprep.subr.mxu0 0.0
      %555 = vmatpush1.msra.mxu0 0.0
      %556 = vmatprep.subr.mxu0 0.0
      %557 = vmatpush1.msra.mxu0 0.0
      %558 = vmatprep.subr.mxu0 0.0
      %559 = vmatpush1.msra.mxu0 0.0
      %560 = vmatprep.subr.mxu0 0.0
      %561 = vmatpush1.msra.mxu0 0.0
      %562 = vmatprep.subr.mxu0 0.0
      %563 = vmatpush1.msra.mxu0 0.0
      %564 = vmatprep.mubr.f32.mxu0 0.0
      %565 = vmatmul.mubr.f32.gmra.mrb[0].mxu0 %v485
      %v566 = vpop.f32.mrb[0].mxu0
      %v567 = vadd.f32 %v481, %v566
      %v568 = vpop.f32.mrb[0].mxu0
      %569 = vmatprep.mubr.f32.mxu0 0.0
      %570 = vmatmul.mubr.f32.gmra.mrb[0].mxu0 %v488
      %v571 = vpop.f32.mrb[0].mxu0
      %v572 = vadd.f32 %v481, %v571
      %v573 = vpop.f32.mrb[0].mxu0
      %574 = vmatprep.mubr.f32.mxu0 0.0
      %575 = vmatmul.mubr.f32.gmra.mrb[0].mxu0 %v491
      %v576 = vpop.f32.mrb[0].mxu0
      %v577 = vadd.f32 %v481, %v576
      %v578 = vpop.f32.mrb[0].mxu0
      %579 = vmatprep.mubr.f32.mxu0 0.0
      %580 = vmatmul.mubr.f32.gmra.mrb[0].mxu0 %v494
      %v581 = vpop.f32.mrb[0].mxu0
      %v582 = vadd.f32 %v481, %v581
      %v583 = vpop.f32.mrb[0].mxu0
      %584 = vdwg.mxu0
      %v585 = vmax.f32 %v567, 0.0
      %v586 = vmax.f32 %v572, 0.0
      %v587 = vmax.f32 %v577, 0.0
      %v588 = vmax.f32 %v582, 0.0
      %v589 = vld [vmem:[%s6] sm:$0xff]
      %v590 = vld [vmem:[%s6 + $0x8] sm:$0xff]
      %v591 = vld [vmem:[%s6 + $0x10] sm:$0xff]
      %v592 = vld [vmem:[%s6 + $0x18] sm:$0xff]
      %vm593 = vcmask 261120
      %v595 = vsel %vm593, %v585, 0
      %v598 = vsel %vm593, %v586, 0
      %v601 = vsel %vm593, %v587, 0
      %v604 = vsel %vm593, %v588, 0
      %606 = vmatprep.subr.mxu0 0.0
      %607 = vmatpush1.msra.mxu0 %v589
      %608 = vmatprep.subr.mxu0 0.0
      %609 = vmatpush1.msra.mxu0 %v590
      %610 = vmatprep.subr.mxu0 0.0
      %611 = vmatpush1.msra.mxu0 %v591
      %612 = vmatprep.subr.mxu0 0.0
      %613 = vmatpush1.msra.mxu0 %v592
      %614 = vmatprep.subr.mxu0 0.0
      %615 = vmatpush1.msra.mxu0 0.0
      %616 = vmatprep.subr.mxu0 0.0
      %617 = vmatpush1.msra.mxu0 0.0
      %618 = vmatprep.subr.mxu0 0.0
      %619 = vmatpush1.msra.mxu0 0.0
      %620 = vmatprep.subr.mxu0 0.0
      %621 = vmatpush1.msra.mxu0 0.0
      %622 = vmatprep.subr.mxu0 0.0
      %623 = vmatpush1.msra.mxu0 0.0
      %624 = vmatprep.subr.mxu0 0.0
      %625 = vmatpush1.msra.mxu0 0.0
      %626 = vmatprep.subr.mxu0 0.0
      %627 = vmatpush1.msra.mxu0 0.0
      %628 = vmatprep.subr.mxu0 0.0
      %629 = vmatpush1.msra.mxu0 0.0
      %630 = vmatprep.subr.mxu0 0.0
      %631 = vmatpush1.msra.mxu0 0.0
      %632 = vmatprep.subr.mxu0 0.0
      %633 = vmatpush1.msra.mxu0 0.0
      %634 = vmatprep.subr.mxu0 0.0
      %635 = vmatpush1.msra.mxu0 0.0
      %636 = vmatprep.subr.mxu0 0.0
      %637 = vmatpush1.msra.mxu0 0.0
      %638 = vmatprep.subr.mxu0 0.0
      %639 = vmatpush1.msra.mxu0 0.0
      %640 = vmatprep.subr.mxu0 0.0
      %641 = vmatpush1.msra.mxu0 0.0
      %642 = vmatprep.subr.mxu0 0.0
      %643 = vmatpush1.msra.mxu0 0.0
      %644 = vmatprep.subr.mxu0 0.0
      %645 = vmatpush1.msra.mxu0 0.0
      %646 = vmatprep.subr.mxu0 0.0
      %647 = vmatpush1.msra.mxu0 0.0
      %648 = vmatprep.subr.mxu0 0.0
      %649 = vmatpush1.msra.mxu0 0.0
      %650 = vmatprep.subr.mxu0 0.0
      %651 = vmatpush1.msra.mxu0 0.0
      %652 = vmatprep.subr.mxu0 0.0
      %653 = vmatpush1.msra.mxu0 0.0
      %654 = vmatprep.subr.mxu0 0.0
      %655 = vmatpush1.msra.mxu0 0.0
      %656 = vmatprep.subr.mxu0 0.0
      %657 = vmatpush1.msra.mxu0 0.0
      %658 = vmatprep.subr.mxu0 0.0
      %659 = vmatpush1.msra.mxu0 0.0
      %660 = vmatprep.subr.mxu0 0.0
      %661 = vmatpush1.msra.mxu0 0.0
      %662 = vmatprep.subr.mxu0 0.0
      %663 = vmatpush1.msra.mxu0 0.0
      %664 = vmatprep.subr.mxu0 0.0
      %665 = vmatpush1.msra.mxu0 0.0
      %666 = vmatprep.subr.mxu0 0.0
      %667 = vmatpush1.msra.mxu0 0.0
      %668 = vmatprep.subr.mxu0 0.0
      %669 = vmatpush1.msra.mxu0 0.0
      %670 = vmatprep.mubr.f32.mxu0 0.0
      %671 = vmatmul.mubr.f32.gmra.mrb[0].mxu0 %v595
      %v672 = vpop.f32.mrb[0].mxu0
      %v673 = vadd.f32 0.0, %v672
      %v674 = vpop.f32.mrb[0].mxu0
      %675 = vmatprep.mubr.f32.mxu0 0.0
      %676 = vmatmul.mubr.f32.gmra.mrb[0].mxu0 %v598
      %v677 = vpop.f32.mrb[0].mxu0
      %v678 = vadd.f32 0.0, %v677
      %v679 = vpop.f32.mrb[0].mxu0
      %680 = vmatprep.mubr.f32.mxu0 0.0
      %681 = vmatmul.mubr.f32.gmra.mrb[0].mxu0 %v601
      %v682 = vpop.f32.mrb[0].mxu0
      %v683 = vadd.f32 0.0, %v682
      %v684 = vpop.f32.mrb[0].mxu0
      %685 = vmatprep.mubr.f32.mxu0 0.0
      %686 = vmatmul.mubr.f32.gmra.mrb[0].mxu0 %v604
      %v687 = vpop.f32.mrb[0].mxu0
      %v688 = vadd.f32 0.0, %v687
      %v689 = vpop.f32.mrb[0].mxu0
      %690 = vdwg.mxu0
      %v691 = vadd.f32 %v471, %v673
      %v692 = vadd.f32 %v472, %v678
      %v693 = vadd.f32 %v473, %v683
      %v694 = vadd.f32 %v474, %v688
      %v695 = vld [vmem:[%s7] sm:$0x1]
      %v697 = vlaneseq
      %v698 = vshrl.u32 %v697, 7
      %v699 = vsub.s32 0, %v698
      %v700 = vrot.slane %v695, %v699
      %v702 = vadd.f32 %v691, %v700
      %v703 = vadd.f32 %v692, %v700
      %v704 = vadd.f32 %v693, %v700
      %v705 = vadd.f32 %v694, %v700
      %v706 = vld [vmem:[%s455] sm:$0x3]
      %v707 = vld [vmem:[%s460] sm:$0xff]
      %v708 = vld [vmem:[%s460 + $0x8] sm:$0xff]
      %v709 = vld [vmem:[%s460 + $0x10] sm:$0xff]
      %v710 = vld [vmem:[%s460 + $0x18] sm:$0xff]
      %v711 = vlaneseq
      %v712 = vshrl.u32 %v711, 7
      %v713 = vadd.s32 %v712, 8
      %v714 = vlaneseq
      %v715 = vand.u32 %v714, 127
      %v716 = vlaneseq
      %v717 = vshrl.u32 %v716, 7
      %v718 = vsub.s32 0, %v717
      %v719 = vrot.slane %v706, %v718
      %vm720 = vcmp.eq.s32.totalorder %v719, %v712
      %vm721 = vcmp.eq.s32.totalorder %v719, %v713
      %v722 = vsel %vm720, 1, 0
      %v723 = vsel %vm721, 1, 0
      %v724 = vcvt.s32.f32 %v722
      %v725 = vcvt.s32.f32 %v723
      %v726 = vlaneseq
      %v727 = vshrl.u32 %v726, 7
      %v728 = vsub.s32 1, %v727
      %v729 = vrot.slane %v706, %v728
      %vm730 = vcmp.eq.s32.totalorder %v729, %v712
      %vm731 = vcmp.eq.s32.totalorder %v729, %v713
      %v732 = vsel %vm730, 1, 0
      %v733 = vsel %vm731, 1, 0
      %v734 = vcvt.s32.f32 %v732
      %v735 = vcvt.s32.f32 %v733
      %736 = vset.pattern.permute.xlu0 0
      %737 = vperm.xlu0 %736, %v707
      %v738 = vpop.permute.xlu0 %737
      %739 = vset.pattern.permute.xlu0 0
      %740 = vperm.xlu0 %739, %v708
      %v741 = vpop.permute.xlu0 %740
      %742 = vset.pattern.permute.xlu0 0
      %743 = vperm.xlu0 %742, %v709
      %v744 = vpop.permute.xlu0 %743
      %745 = vset.pattern.permute.xlu0 0
      %746 = vperm.xlu0 %745, %v710
      %v747 = vpop.permute.xlu0 %746
      %vm748 = vcmp.eq.s32.totalorder %v738, %v715
      %vm749 = vcmp.eq.s32.totalorder %v741, %v715
      %vm750 = vcmp.eq.s32.totalorder %v744, %v715
      %vm751 = vcmp.eq.s32.totalorder %v747, %v715
      %v752 = vsel %vm748, 1, 0
      %v753 = vsel %vm749, 1, 0
      %v754 = vsel %vm750, 1, 0
      %v755 = vsel %vm751, 1, 0
      %v756 = vcvt.s32.f32 %v752
      %v757 = vcvt.s32.f32 %v753
      %v758 = vcvt.s32.f32 %v754
      %v759 = vcvt.s32.f32 %v755
      %v761 = vsel %vm593, %v724, 0
      %v764 = vsel %vm593, %v725, 0
      %766 = vmatprep.subr.mxu0 0.0
      %767 = vmatpush1.msra.mxu0 %v702
      %768 = vmatprep.subr.mxu0 0.0
      %769 = vmatpush1.msra.mxu0 %v703
      %770 = vmatprep.subr.mxu0 0.0
      %771 = vmatpush1.msra.mxu0 %v704
      %772 = vmatprep.subr.mxu0 0.0
      %773 = vmatpush1.msra.mxu0 %v705
      %774 = vmatprep.subr.mxu0 0.0
      %775 = vmatpush1.msra.mxu0 0.0
      %776 = vmatprep.subr.mxu0 0.0
      %777 = vmatpush1.msra.mxu0 0.0
      %778 = vmatprep.subr.mxu0 0.0
      %779 = vmatpush1.msra.mxu0 0.0
      %780 = vmatprep.subr.mxu0 0.0
      %781 = vmatpush1.msra.mxu0 0.0
      %782 = vmatprep.subr.mxu0 0.0
      %783 = vmatpush1.msra.mxu0 0.0
      %784 = vmatprep.subr.mxu0 0.0
      %785 = vmatpush1.msra.mxu0 0.0
      %786 = vmatprep.subr.mxu0 0.0
      %787 = vmatpush1.msra.mxu0 0.0
      %788 = vmatprep.subr.mxu0 0.0
      %789 = vmatpush1.msra.mxu0 0.0
      %790 = vmatprep.subr.mxu0 0.0
      %791 = vmatpush1.msra.mxu0 0.0
      %792 = vmatprep.subr.mxu0 0.0
      %793 = vmatpush1.msra.mxu0 0.0
      %794 = vmatprep.subr.mxu0 0.0
      %795 = vmatpush1.msra.mxu0 0.0
      %796 = vmatprep.subr.mxu0 0.0
      %797 = vmatpush1.msra.mxu0 0.0
      %798 = vmatprep.subr.mxu0 0.0
      %799 = vmatpush1.msra.mxu0 0.0
      %800 = vmatprep.subr.mxu0 0.0
      %801 = vmatpush1.msra.mxu0 0.0
      %802 = vmatprep.subr.mxu0 0.0
      %803 = vmatpush1.msra.mxu0 0.0
      %804 = vmatprep.subr.mxu0 0.0
      %805 = vmatpush1.msra.mxu0 0.0
      %806 = vmatprep.subr.mxu0 0.0
      %807 = vmatpush1.msra.mxu0 0.0
      %808 = vmatprep.subr.mxu0 0.0
      %809 = vmatpush1.msra.mxu0 0.0
      %810 = vmatprep.subr.mxu0 0.0
      %811 = vmatpush1.msra.mxu0 0.0
      %812 = vmatprep.subr.mxu0 0.0
      %813 = vmatpush1.msra.mxu0 0.0
      %814 = vmatprep.subr.mxu0 0.0
      %815 = vmatpush1.msra.mxu0 0.0
      %816 = vmatprep.subr.mxu0 0.0
      %817 = vmatpush1.msra.mxu0 0.0
      %818 = vmatprep.subr.mxu0 0.0
      %819 = vmatpush1.msra.mxu0 0.0
      %820 = vmatprep.subr.mxu0 0.0
      %821 = vmatpush1.msra.mxu0 0.0
      %822 = vmatprep.subr.mxu0 0.0
      %823 = vmatpush1.msra.mxu0 0.0
      %824 = vmatprep.subr.mxu0 0.0
      %825 = vmatpush1.msra.mxu0 0.0
      %826 = vmatprep.subr.mxu0 0.0
      %827 = vmatpush1.msra.mxu0 0.0
      %828 = vmatprep.subr.mxu0 0.0
      %829 = vmatpush1.msra.mxu0 0.0
      %830 = vmatprep.mubr.f32.mxu0 0.0
      %831 = vmatmul.mubr.f32.gmra.mrb[0].mxu0 %v761
      %v832 = vpop.f32.mrb[0].mxu0
      %v833 = vadd.f32 0.0, %v832
      %v834 = vpop.f32.mrb[0].mxu0
      %835 = vmatprep.mubr.f32.mxu0 0.0
      %836 = vmatmul.mubr.f32.gmra.mrb[0].mxu0 %v764
      %v837 = vpop.f32.mrb[0].mxu0
      %v838 = vadd.f32 0.0, %v837
      %v839 = vpop.f32.mrb[0].mxu0
      %840 = vdwg.mxu0
      %842 = vset.pattern.permute.xlu0 0
      %843 = vperm.xlu0 %842, %v702
      %v844 = vpop.permute.xlu0 %843
      %847 = vset.pattern.permute.xlu0 0
      %848 = vperm.xlu0 %847, %v703
      %v849 = vpop.permute.xlu0 %848
      %852 = vset.pattern.permute.xlu0 0
      %853 = vperm.xlu0 %852, %v704
      %v854 = vpop.permute.xlu0 %853
      %857 = vset.pattern.permute.xlu0 0
      %858 = vperm.xlu0 %857, %v705
      %v859 = vpop.permute.xlu0 %858
      %v861 = vmul.f32 %v844, %v756
      %v862 = vmul.f32 %v849, %v757
      %v863 = vmul.f32 %v854, %v758
      %v864 = vmul.f32 %v859, %v759
      %v866 = vsel %vm593, %v734, 0
      %v869 = vsel %vm593, %v735, 0
      %871 = vmatprep.subr.mxu0 0.0
      %872 = vmatpush1.msra.mxu0 %v861
      %873 = vmatprep.subr.mxu0 0.0
      %874 = vmatpush1.msra.mxu0 %v862
      %875 = vmatprep.subr.mxu0 0.0
      %876 = vmatpush1.msra.mxu0 %v863
      %877 = vmatprep.subr.mxu0 0.0
      %878 = vmatpush1.msra.mxu0 %v864
      %879 = vmatprep.subr.mxu0 0.0
      %880 = vmatpush1.msra.mxu0 0.0
      %881 = vmatprep.subr.mxu0 0.0
      %882 = vmatpush1.msra.mxu0 0.0
      %883 = vmatprep.subr.mxu0 0.0
      %884 = vmatpush1.msra.mxu0 0.0
      %885 = vmatprep.subr.mxu0 0.0
      %886 = vmatpush1.msra.mxu0 0.0
      %887 = vmatprep.subr.mxu0 0.0
      %888 = vmatpush1.msra.mxu0 0.0
      %889 = vmatprep.subr.mxu0 0.0
      %890 = vmatpush1.msra.mxu0 0.0
      %891 = vmatprep.subr.mxu0 0.0
      %892 = vmatpush1.msra.mxu0 0.0
      %893 = vmatprep.subr.mxu0 0.0
      %894 = vmatpush1.msra.mxu0 0.0
      %895 = vmatprep.subr.mxu0 0.0
      %896 = vmatpush1.msra.mxu0 0.0
      %897 = vmatprep.subr.mxu0 0.0
      %898 = vmatpush1.msra.mxu0 0.0
      %899 = vmatprep.subr.mxu0 0.0
      %900 = vmatpush1.msra.mxu0 0.0
      %901 = vmatprep.subr.mxu0 0.0
      %902 = vmatpush1.msra.mxu0 0.0
      %903 = vmatprep.subr.mxu0 0.0
      %904 = vmatpush1.msra.mxu0 0.0
      %905 = vmatprep.subr.mxu0 0.0
      %906 = vmatpush1.msra.mxu0 0.0
      %907 = vmatprep.subr.mxu0 0.0
      %908 = vmatpush1.msra.mxu0 0.0
      %909 = vmatprep.subr.mxu0 0.0
      %910 = vmatpush1.msra.mxu0 0.0
      %911 = vmatprep.subr.mxu0 0.0
      %912 = vmatpush1.msra.mxu0 0.0
      %913 = vmatprep.subr.mxu0 0.0
      %914 = vmatpush1.msra.mxu0 0.0
      %915 = vmatprep.subr.mxu0 0.0
      %916 = vmatpush1.msra.mxu0 0.0
      %917 = vmatprep.subr.mxu0 0.0
      %918 = vmatpush1.msra.mxu0 0.0
      %919 = vmatprep.subr.mxu0 0.0
      %920 = vmatpush1.msra.mxu0 0.0
      %921 = vmatprep.subr.mxu0 0.0
      %922 = vmatpush1.msra.mxu0 0.0
      %923 = vmatprep.subr.mxu0 0.0
      %924 = vmatpush1.msra.mxu0 0.0
      %925 = vmatprep.subr.mxu0 0.0
      %926 = vmatpush1.msra.mxu0 0.0
      %927 = vmatprep.subr.mxu0 0.0
      %928 = vmatpush1.msra.mxu0 0.0
      %929 = vmatprep.subr.mxu0 0.0
      %930 = vmatpush1.msra.mxu0 0.0
      %931 = vmatprep.subr.mxu0 0.0
      %932 = vmatpush1.msra.mxu0 0.0
      %933 = vmatprep.subr.mxu0 0.0
      %934 = vmatpush1.msra.mxu0 0.0
      %935 = vmatprep.mubr.f32.mxu0 0.0
      %936 = vmatmul.mubr.f32.gmra.mrb[0].mxu0 %v866
      %v937 = vpop.f32.mrb[0].mxu0
      %v938 = vadd.f32 0.0, %v937
      %v939 = vpop.f32.mrb[0].mxu0
      %940 = vmatprep.mubr.f32.mxu0 0.0
      %941 = vmatmul.mubr.f32.gmra.mrb[0].mxu0 %v869
      %v942 = vpop.f32.mrb[0].mxu0
      %v943 = vadd.f32 0.0, %v942
      %v944 = vpop.f32.mrb[0].mxu0
      %945 = vdwg.mxu0
      %946 = vset.pattern.permute.xlu0 1
      %947 = vperm.xlu0 %946, %v702
      %v948 = vpop.permute.xlu0 %947
      %950 = vset.pattern.permute.xlu0 1
      %951 = vperm.xlu0 %950, %v703
      %v952 = vpop.permute.xlu0 %951
      %954 = vset.pattern.permute.xlu0 1
      %955 = vperm.xlu0 %954, %v704
      %v956 = vpop.permute.xlu0 %955
      %958 = vset.pattern.permute.xlu0 1
      %959 = vperm.xlu0 %958, %v705
      %v960 = vpop.permute.xlu0 %959
      %v962 = vmul.f32 %v948, %v756
      %v963 = vmul.f32 %v952, %v757
      %v964 = vmul.f32 %v956, %v758
      %v965 = vmul.f32 %v960, %v759
      %966 = vmatprep.subr.mxu0 0.0
      %967 = vmatpush1.msra.mxu0 %v962
      %968 = vmatprep.subr.mxu0 0.0
      %969 = vmatpush1.msra.mxu0 %v963
      %970 = vmatprep.subr.mxu0 0.0
      %971 = vmatpush1.msra.mxu0 %v964
      %972 = vmatprep.subr.mxu0 0.0
      %973 = vmatpush1.msra.mxu0 %v965
      %974 = vmatprep.subr.mxu0 0.0
      %975 = vmatpush1.msra.mxu0 0.0
      %976 = vmatprep.subr.mxu0 0.0
      %977 = vmatpush1.msra.mxu0 0.0
      %978 = vmatprep.subr.mxu0 0.0
      %979 = vmatpush1.msra.mxu0 0.0
      %980 = vmatprep.subr.mxu0 0.0
      %981 = vmatpush1.msra.mxu0 0.0
      %982 = vmatprep.subr.mxu0 0.0
      %983 = vmatpush1.msra.mxu0 0.0
      %984 = vmatprep.subr.mxu0 0.0
      %985 = vmatpush1.msra.mxu0 0.0
      %986 = vmatprep.subr.mxu0 0.0
      %987 = vmatpush1.msra.mxu0 0.0
      %988 = vmatprep.subr.mxu0 0.0
      %989 = vmatpush1.msra.mxu0 0.0
      %990 = vmatprep.subr.mxu0 0.0
      %991 = vmatpush1.msra.mxu0 0.0
      %992 = vmatprep.subr.mxu0 0.0
      %993 = vmatpush1.msra.mxu0 0.0
      %994 = vmatprep.subr.mxu0 0.0
      %995 = vmatpush1.msra.mxu0 0.0
      %996 = vmatprep.subr.mxu0 0.0
      %997 = vmatpush1.msra.mxu0 0.0
      %998 = vmatprep.subr.mxu0 0.0
      %999 = vmatpush1.msra.mxu0 0.0
      %1000 = vmatprep.subr.mxu0 0.0
      %1001 = vmatpush1.msra.mxu0 0.0
      %1002 = vmatprep.subr.mxu0 0.0
      %1003 = vmatpush1.msra.mxu0 0.0
      %1004 = vmatprep.subr.mxu0 0.0
      %1005 = vmatpush1.msra.mxu0 0.0
      %1006 = vmatprep.subr.mxu0 0.0
      %1007 = vmatpush1.msra.mxu0 0.0
      %1008 = vmatprep.subr.mxu0 0.0
      %1009 = vmatpush1.msra.mxu0 0.0
      %1010 = vmatprep.subr.mxu0 0.0
      %1011 = vmatpush1.msra.mxu0 0.0
      %1012 = vmatprep.subr.mxu0 0.0
      %1013 = vmatpush1.msra.mxu0 0.0
      %1014 = vmatprep.subr.mxu0 0.0
      %1015 = vmatpush1.msra.mxu0 0.0
      %1016 = vmatprep.subr.mxu0 0.0
      %1017 = vmatpush1.msra.mxu0 0.0
      %1018 = vmatprep.subr.mxu0 0.0
      %1019 = vmatpush1.msra.mxu0 0.0
      %1020 = vmatprep.subr.mxu0 0.0
      %1021 = vmatpush1.msra.mxu0 0.0
      %1022 = vmatprep.subr.mxu0 0.0
      %1023 = vmatpush1.msra.mxu0 0.0
      %1024 = vmatprep.subr.mxu0 0.0
      %1025 = vmatpush1.msra.mxu0 0.0
      %1026 = vmatprep.subr.mxu0 0.0
      %1027 = vmatpush1.msra.mxu0 0.0
      %1028 = vmatprep.subr.mxu0 0.0
      %1029 = vmatpush1.msra.mxu0 0.0
      %1030 = vmatprep.mubr.f32.mxu0 0.0
      %1031 = vmatmul.mubr.f32.gmra.mrb[0].mxu0 %v866
      %v1032 = vpop.f32.mrb[0].mxu0
      %v1033 = vadd.f32 0.0, %v1032
      %v1034 = vpop.f32.mrb[0].mxu0
      %1035 = vmatprep.mubr.f32.mxu0 0.0
      %1036 = vmatmul.mubr.f32.gmra.mrb[0].mxu0 %v869
      %v1037 = vpop.f32.mrb[0].mxu0
      %v1038 = vadd.f32 0.0, %v1037
      %v1039 = vpop.f32.mrb[0].mxu0
      %1040 = vdwg.mxu0
      %v1041 = vld [vmem:[%s451] sm:$0xff]
      %v1042 = vld [vmem:[%s451 + $0x8] sm:$0xff]
      %1044 = vset.pattern.permute.xlu0 0
      %1045 = vperm.xlu0 %1044, %v833
      %v1046 = vpop.permute.xlu0 %1045
      %1049 = vset.pattern.permute.xlu0 0
      %1050 = vperm.xlu0 %1049, %v838
      %v1051 = vpop.permute.xlu0 %1050
      %v1053 = vmul.f32 %v1046, %v1041
      %v1054 = vmul.f32 %v1051, %v1042
      %vm1055 = vcmask 130048
      %v1057 = vsel %vm1055, %v938, 0
      %v1060 = vsel %vm1055, %v943, 0
      %1062 = vmatprep.subr.mxu0 0.0
      %1063 = vmatpush1.msra.mxu0 %v1041
      %1064 = vmatprep.subr.mxu0 0.0
      %1065 = vmatpush1.msra.mxu0 %v1042
      %1066 = vmatprep.subr.mxu0 0.0
      %1067 = vmatpush1.msra.mxu0 0.0
      %1068 = vmatprep.subr.mxu0 0.0
      %1069 = vmatpush1.msra.mxu0 0.0
      %1070 = vmatprep.subr.mxu0 0.0
      %1071 = vmatpush1.msra.mxu0 0.0
      %1072 = vmatprep.subr.mxu0 0.0
      %1073 = vmatpush1.msra.mxu0 0.0
      %1074 = vmatprep.subr.mxu0 0.0
      %1075 = vmatpush1.msra.mxu0 0.0
      %1076 = vmatprep.subr.mxu0 0.0
      %1077 = vmatpush1.msra.mxu0 0.0
      %1078 = vmatprep.subr.mxu0 0.0
      %1079 = vmatpush1.msra.mxu0 0.0
      %1080 = vmatprep.subr.mxu0 0.0
      %1081 = vmatpush1.msra.mxu0 0.0
      %1082 = vmatprep.subr.mxu0 0.0
      %1083 = vmatpush1.msra.mxu0 0.0
      %1084 = vmatprep.subr.mxu0 0.0
      %1085 = vmatpush1.msra.mxu0 0.0
      %1086 = vmatprep.subr.mxu0 0.0
      %1087 = vmatpush1.msra.mxu0 0.0
      %1088 = vmatprep.subr.mxu0 0.0
      %1089 = vmatpush1.msra.mxu0 0.0
      %1090 = vmatprep.subr.mxu0 0.0
      %1091 = vmatpush1.msra.mxu0 0.0
      %1092 = vmatprep.subr.mxu0 0.0
      %1093 = vmatpush1.msra.mxu0 0.0
      %1094 = vmatprep.subr.mxu0 0.0
      %1095 = vmatpush1.msra.mxu0 0.0
      %1096 = vmatprep.subr.mxu0 0.0
      %1097 = vmatpush1.msra.mxu0 0.0
      %1098 = vmatprep.subr.mxu0 0.0
      %1099 = vmatpush1.msra.mxu0 0.0
      %1100 = vmatprep.subr.mxu0 0.0
      %1101 = vmatpush1.msra.mxu0 0.0
      %1102 = vmatprep.subr.mxu0 0.0
      %1103 = vmatpush1.msra.mxu0 0.0
      %1104 = vmatprep.subr.mxu0 0.0
      %1105 = vmatpush1.msra.mxu0 0.0
      %1106 = vmatprep.subr.mxu0 0.0
      %1107 = vmatpush1.msra.mxu0 0.0
      %1108 = vmatprep.subr.mxu0 0.0
      %1109 = vmatpush1.msra.mxu0 0.0
      %1110 = vmatprep.subr.mxu0 0.0
      %1111 = vmatpush1.msra.mxu0 0.0
      %1112 = vmatprep.subr.mxu0 0.0
      %1113 = vmatpush1.msra.mxu0 0.0
      %1114 = vmatprep.subr.mxu0 0.0
      %1115 = vmatpush1.msra.mxu0 0.0
      %1116 = vmatprep.subr.mxu0 0.0
      %1117 = vmatpush1.msra.mxu0 0.0
      %1118 = vmatprep.subr.mxu0 0.0
      %1119 = vmatpush1.msra.mxu0 0.0
      %1120 = vmatprep.subr.mxu0 0.0
      %1121 = vmatpush1.msra.mxu0 0.0
      %1122 = vmatprep.subr.mxu0 0.0
      %1123 = vmatpush1.msra.mxu0 0.0
      %1124 = vmatprep.subr.mxu0 0.0
      %1125 = vmatpush1.msra.mxu0 0.0
      %1126 = vmatprep.mubr.f32.mxu0 0.0
      %1127 = vmatmul.mubr.f32.gmra.mrb[0].mxu0 %v1057
      %v1128 = vpop.f32.mrb[0].mxu0
      %v1129 = vadd.f32 0.0, %v1128
      %v1130 = vpop.f32.mrb[0].mxu0
      %1131 = vmatprep.mubr.f32.mxu0 0.0
      %1132 = vmatmul.mubr.f32.gmra.mrb[0].mxu0 %v1060
      %v1133 = vpop.f32.mrb[0].mxu0
      %v1134 = vadd.f32 0.0, %v1133
      %v1135 = vpop.f32.mrb[0].mxu0
      %1136 = vdwg.mxu0
      %v1137 = vsub.f32 %v1053, %v1129
      %v1138 = vsub.f32 %v1054, %v1134
      %v1139 = vsub.f32 %v1137, %v1041
      %v1140 = vsub.f32 %v1138, %v1042
      %1141 = vset.pattern.permute.xlu0 1
      %1142 = vperm.xlu0 %1141, %v833
      %v1143 = vpop.permute.xlu0 %1142
      %1145 = vset.pattern.permute.xlu0 1
      %1146 = vperm.xlu0 %1145, %v838
      %v1147 = vpop.permute.xlu0 %1146
      %v1149 = vmul.f32 %v1143, %v1041
      %v1150 = vmul.f32 %v1147, %v1042
      %v1152 = vsel %vm1055, %v1033, 0
      %v1155 = vsel %vm1055, %v1038, 0
      %1157 = vmatprep.subr.mxu0 0.0
      %1158 = vmatpush1.msra.mxu0 %v1041
      %1159 = vmatprep.subr.mxu0 0.0
      %1160 = vmatpush1.msra.mxu0 %v1042
      %1161 = vmatprep.subr.mxu0 0.0
      %1162 = vmatpush1.msra.mxu0 0.0
      %1163 = vmatprep.subr.mxu0 0.0
      %1164 = vmatpush1.msra.mxu0 0.0
      %1165 = vmatprep.subr.mxu0 0.0
      %1166 = vmatpush1.msra.mxu0 0.0
      %1167 = vmatprep.subr.mxu0 0.0
      %1168 = vmatpush1.msra.mxu0 0.0
      %1169 = vmatprep.subr.mxu0 0.0
      %1170 = vmatpush1.msra.mxu0 0.0
      %1171 = vmatprep.subr.mxu0 0.0
      %1172 = vmatpush1.msra.mxu0 0.0
      %1173 = vmatprep.subr.mxu0 0.0
      %1174 = vmatpush1.msra.mxu0 0.0
      %1175 = vmatprep.subr.mxu0 0.0
      %1176 = vmatpush1.msra.mxu0 0.0
      %1177 = vmatprep.subr.mxu0 0.0
      %1178 = vmatpush1.msra.mxu0 0.0
      %1179 = vmatprep.subr.mxu0 0.0
      %1180 = vmatpush1.msra.mxu0 0.0
      %1181 = vmatprep.subr.mxu0 0.0
      %1182 = vmatpush1.msra.mxu0 0.0
      %1183 = vmatprep.subr.mxu0 0.0
      %1184 = vmatpush1.msra.mxu0 0.0
      %1185 = vmatprep.subr.mxu0 0.0
      %1186 = vmatpush1.msra.mxu0 0.0
      %1187 = vmatprep.subr.mxu0 0.0
      %1188 = vmatpush1.msra.mxu0 0.0
      %1189 = vmatprep.subr.mxu0 0.0
      %1190 = vmatpush1.msra.mxu0 0.0
      %1191 = vmatprep.subr.mxu0 0.0
      %1192 = vmatpush1.msra.mxu0 0.0
      %1193 = vmatprep.subr.mxu0 0.0
      %1194 = vmatpush1.msra.mxu0 0.0
      %1195 = vmatprep.subr.mxu0 0.0
      %1196 = vmatpush1.msra.mxu0 0.0
      %1197 = vmatprep.subr.mxu0 0.0
      %1198 = vmatpush1.msra.mxu0 0.0
      %1199 = vmatprep.subr.mxu0 0.0
      %1200 = vmatpush1.msra.mxu0 0.0
      %1201 = vmatprep.subr.mxu0 0.0
      %1202 = vmatpush1.msra.mxu0 0.0
      %1203 = vmatprep.subr.mxu0 0.0
      %1204 = vmatpush1.msra.mxu0 0.0
      %1205 = vmatprep.subr.mxu0 0.0
      %1206 = vmatpush1.msra.mxu0 0.0
      %1207 = vmatprep.subr.mxu0 0.0
      %1208 = vmatpush1.msra.mxu0 0.0
      %1209 = vmatprep.subr.mxu0 0.0
      %1210 = vmatpush1.msra.mxu0 0.0
      %1211 = vmatprep.subr.mxu0 0.0
      %1212 = vmatpush1.msra.mxu0 0.0
      %1213 = vmatprep.subr.mxu0 0.0
      %1214 = vmatpush1.msra.mxu0 0.0
      %1215 = vmatprep.subr.mxu0 0.0
      %1216 = vmatpush1.msra.mxu0 0.0
      %1217 = vmatprep.subr.mxu0 0.0
      %1218 = vmatpush1.msra.mxu0 0.0
      %1219 = vmatprep.subr.mxu0 0.0
      %1220 = vmatpush1.msra.mxu0 0.0
      %1221 = vmatprep.mubr.f32.mxu0 0.0
      %1222 = vmatmul.mubr.f32.gmra.mrb[0].mxu0 %v1152
      %v1223 = vpop.f32.mrb[0].mxu0
      %v1224 = vadd.f32 0.0, %v1223
      %v1225 = vpop.f32.mrb[0].mxu0
      %1226 = vmatprep.mubr.f32.mxu0 0.0
      %1227 = vmatmul.mubr.f32.gmra.mrb[0].mxu0 %v1155
      %v1228 = vpop.f32.mrb[0].mxu0
      %v1229 = vadd.f32 0.0, %v1228
      %v1230 = vpop.f32.mrb[0].mxu0
      %1231 = vdwg.mxu0
      %v1232 = vsub.f32 %v1149, %v1224
      %v1233 = vsub.f32 %v1150, %v1229
      %v1234 = vsub.f32 %v1232, %v1041
      %v1235 = vsub.f32 %v1233, %v1042
      %v1236 = vmul.f32 %v1046, %v1139
      %v1237 = vmul.f32 %v1051, %v1140
      %1238 = vmatprep.subr.mxu0 0.0
      %1239 = vmatpush1.msra.mxu0 %v1139
      %1240 = vmatprep.subr.mxu0 0.0
      %1241 = vmatpush1.msra.mxu0 %v1140
      %1242 = vmatprep.subr.mxu0 0.0
      %1243 = vmatpush1.msra.mxu0 0.0
      %1244 = vmatprep.subr.mxu0 0.0
      %1245 = vmatpush1.msra.mxu0 0.0
      %1246 = vmatprep.subr.mxu0 0.0
      %1247 = vmatpush1.msra.mxu0 0.0
      %1248 = vmatprep.subr.mxu0 0.0
      %1249 = vmatpush1.msra.mxu0 0.0
      %1250 = vmatprep.subr.mxu0 0.0
      %1251 = vmatpush1.msra.mxu0 0.0
      %1252 = vmatprep.subr.mxu0 0.0
      %1253 = vmatpush1.msra.mxu0 0.0
      %1254 = vmatprep.subr.mxu0 0.0
      %1255 = vmatpush1.msra.mxu0 0.0
      %1256 = vmatprep.subr.mxu0 0.0
      %1257 = vmatpush1.msra.mxu0 0.0
      %1258 = vmatprep.subr.mxu0 0.0
      %1259 = vmatpush1.msra.mxu0 0.0
      %1260 = vmatprep.subr.mxu0 0.0
      %1261 = vmatpush1.msra.mxu0 0.0
      %1262 = vmatprep.subr.mxu0 0.0
      %1263 = vmatpush1.msra.mxu0 0.0
      %1264 = vmatprep.subr.mxu0 0.0
      %1265 = vmatpush1.msra.mxu0 0.0
      %1266 = vmatprep.subr.mxu0 0.0
      %1267 = vmatpush1.msra.mxu0 0.0
      %1268 = vmatprep.subr.mxu0 0.0
      %1269 = vmatpush1.msra.mxu0 0.0
      %1270 = vmatprep.subr.mxu0 0.0
      %1271 = vmatpush1.msra.mxu0 0.0
      %1272 = vmatprep.subr.mxu0 0.0
      %1273 = vmatpush1.msra.mxu0 0.0
      %1274 = vmatprep.subr.mxu0 0.0
      %1275 = vmatpush1.msra.mxu0 0.0
      %1276 = vmatprep.subr.mxu0 0.0
      %1277 = vmatpush1.msra.mxu0 0.0
      %1278 = vmatprep.subr.mxu0 0.0
      %1279 = vmatpush1.msra.mxu0 0.0
      %1280 = vmatprep.subr.mxu0 0.0
      %1281 = vmatpush1.msra.mxu0 0.0
      %1282 = vmatprep.subr.mxu0 0.0
      %1283 = vmatpush1.msra.mxu0 0.0
      %1284 = vmatprep.subr.mxu0 0.0
      %1285 = vmatpush1.msra.mxu0 0.0
      %1286 = vmatprep.subr.mxu0 0.0
      %1287 = vmatpush1.msra.mxu0 0.0
      %1288 = vmatprep.subr.mxu0 0.0
      %1289 = vmatpush1.msra.mxu0 0.0
      %1290 = vmatprep.subr.mxu0 0.0
      %1291 = vmatpush1.msra.mxu0 0.0
      %1292 = vmatprep.subr.mxu0 0.0
      %1293 = vmatpush1.msra.mxu0 0.0
      %1294 = vmatprep.subr.mxu0 0.0
      %1295 = vmatpush1.msra.mxu0 0.0
      %1296 = vmatprep.subr.mxu0 0.0
      %1297 = vmatpush1.msra.mxu0 0.0
      %1298 = vmatprep.subr.mxu0 0.0
      %1299 = vmatpush1.msra.mxu0 0.0
      %1300 = vmatprep.subr.mxu0 0.0
      %1301 = vmatpush1.msra.mxu0 0.0
      %1302 = vmatprep.mubr.f32.mxu0 0.0
      %1303 = vmatmul.mubr.f32.gmra.mrb[0].mxu0 %v1057
      %v1304 = vpop.f32.mrb[0].mxu0
      %v1305 = vadd.f32 0.0, %v1304
      %v1306 = vpop.f32.mrb[0].mxu0
      %1307 = vmatprep.mubr.f32.mxu0 0.0
      %1308 = vmatmul.mubr.f32.gmra.mrb[0].mxu0 %v1060
      %v1309 = vpop.f32.mrb[0].mxu0
      %v1310 = vadd.f32 0.0, %v1309
      %v1311 = vpop.f32.mrb[0].mxu0
      %1312 = vdwg.mxu0
      %v1313 = vsub.f32 %v1236, %v1305
      %v1314 = vsub.f32 %v1237, %v1310
      %v1315 = vsub.f32 %v1313, %v1139
      %v1316 = vsub.f32 %v1314, %v1140
      %v1317 = vmul.f32 %v1315, 2.0
      %v1318 = vmul.f32 %v1316, 2.0
      %v1319 = vsub.f32 %v1317, %v1041
      %v1320 = vsub.f32 %v1318, %v1042
      %v1321 = vmul.f32 %v1143, %v1234
      %v1322 = vmul.f32 %v1147, %v1235
      %1323 = vmatprep.subr.mxu0 0.0
      %1324 = vmatpush1.msra.mxu0 %v1234
      %1325 = vmatprep.subr.mxu0 0.0
      %1326 = vmatpush1.msra.mxu0 %v1235
      %1327 = vmatprep.subr.mxu0 0.0
      %1328 = vmatpush1.msra.mxu0 0.0
      %1329 = vmatprep.subr.mxu0 0.0
      %1330 = vmatpush1.msra.mxu0 0.0
      %1331 = vmatprep.subr.mxu0 0.0
      %1332 = vmatpush1.msra.mxu0 0.0
      %1333 = vmatprep.subr.mxu0 0.0
      %1334 = vmatpush1.msra.mxu0 0.0
      %1335 = vmatprep.subr.mxu0 0.0
      %1336 = vmatpush1.msra.mxu0 0.0
      %1337 = vmatprep.subr.mxu0 0.0
      %1338 = vmatpush1.msra.mxu0 0.0
      %1339 = vmatprep.subr.mxu0 0.0
      %1340 = vmatpush1.msra.mxu0 0.0
      %1341 = vmatprep.subr.mxu0 0.0
      %1342 = vmatpush1.msra.mxu0 0.0
      %1343 = vmatprep.subr.mxu0 0.0
      %1344 = vmatpush1.msra.mxu0 0.0
      %1345 = vmatprep.subr.mxu0 0.0
      %1346 = vmatpush1.msra.mxu0 0.0
      %1347 = vmatprep.subr.mxu0 0.0
      %1348 = vmatpush1.msra.mxu0 0.0
      %1349 = vmatprep.subr.mxu0 0.0
      %1350 = vmatpush1.msra.mxu0 0.0
      %1351 = vmatprep.subr.mxu0 0.0
      %1352 = vmatpush1.msra.mxu0 0.0
      %1353 = vmatprep.subr.mxu0 0.0
      %1354 = vmatpush1.msra.mxu0 0.0
      %1355 = vmatprep.subr.mxu0 0.0
      %1356 = vmatpush1.msra.mxu0 0.0
      %1357 = vmatprep.subr.mxu0 0.0
      %1358 = vmatpush1.msra.mxu0 0.0
      %1359 = vmatprep.subr.mxu0 0.0
      %1360 = vmatpush1.msra.mxu0 0.0
      %1361 = vmatprep.subr.mxu0 0.0
      %1362 = vmatpush1.msra.mxu0 0.0
      %1363 = vmatprep.subr.mxu0 0.0
      %1364 = vmatpush1.msra.mxu0 0.0
      %1365 = vmatprep.subr.mxu0 0.0
      %1366 = vmatpush1.msra.mxu0 0.0
      %1367 = vmatprep.subr.mxu0 0.0
      %1368 = vmatpush1.msra.mxu0 0.0
      %1369 = vmatprep.subr.mxu0 0.0
      %1370 = vmatpush1.msra.mxu0 0.0
      %1371 = vmatprep.subr.mxu0 0.0
      %1372 = vmatpush1.msra.mxu0 0.0
      %1373 = vmatprep.subr.mxu0 0.0
      %1374 = vmatpush1.msra.mxu0 0.0
      %1375 = vmatprep.subr.mxu0 0.0
      %1376 = vmatpush1.msra.mxu0 0.0
      %1377 = vmatprep.subr.mxu0 0.0
      %1378 = vmatpush1.msra.mxu0 0.0
      %1379 = vmatprep.subr.mxu0 0.0
      %1380 = vmatpush1.msra.mxu0 0.0
      %1381 = vmatprep.subr.mxu0 0.0
      %1382 = vmatpush1.msra.mxu0 0.0
      %1383 = vmatprep.subr.mxu0 0.0
      %1384 = vmatpush1.msra.mxu0 0.0
      %1385 = vmatprep.subr.mxu0 0.0
      %1386 = vmatpush1.msra.mxu0 0.0
      %1387 = vmatprep.mubr.f32.mxu0 0.0
      %1388 = vmatmul.mubr.f32.gmra.mrb[0].mxu0 %v1152
      %v1389 = vpop.f32.mrb[0].mxu0
      %v1390 = vadd.f32 0.0, %v1389
      %v1391 = vpop.f32.mrb[0].mxu0
      %1392 = vmatprep.mubr.f32.mxu0 0.0
      %1393 = vmatmul.mubr.f32.gmra.mrb[0].mxu0 %v1155
      %v1394 = vpop.f32.mrb[0].mxu0
      %v1395 = vadd.f32 0.0, %v1394
      %v1396 = vpop.f32.mrb[0].mxu0
      %1397 = vdwg.mxu0
      %v1398 = vsub.f32 %v1321, %v1390
      %v1399 = vsub.f32 %v1322, %v1395
      %v1400 = vsub.f32 %v1398, %v1234
      %v1401 = vsub.f32 %v1399, %v1235
      %v1402 = vmul.f32 %v1400, 2.0
      %v1403 = vmul.f32 %v1401, 2.0
      %v1404 = vsub.f32 %v1402, %v1041
      %v1405 = vsub.f32 %v1403, %v1042
      %1408 = vrot.lane.b32.xlu0 %v1139, 4
      %v1409 = vpop.permute.xlu0 %1408
      %1410 = vrot.lane.b32.xlu0 %v1140, 4
      %v1411 = vpop.permute.xlu0 %1410
      %1416 = vrot.lane.b32.xlu0 %v1234, 8
      %v1417 = vpop.permute.xlu0 %1416
      %1418 = vrot.lane.b32.xlu0 %v1235, 8
      %v1419 = vpop.permute.xlu0 %1418
      %1424 = vrot.lane.b32.xlu0 %v1319, 12
      %v1425 = vpop.permute.xlu0 %1424
      %1426 = vrot.lane.b32.xlu0 %v1320, 12
      %v1427 = vpop.permute.xlu0 %1426
      %1432 = vrot.lane.b32.xlu0 %v1404, 16
      %v1433 = vpop.permute.xlu0 %1432
      %1434 = vrot.lane.b32.xlu0 %v1405, 16
      %v1435 = vpop.permute.xlu0 %1434
      %vm1438 = vcmask 31744
      %v1439 = vsel %vm1438, %v1041, %v1409
      %v1440 = vsel %vm1438, %v1042, %v1411
      %vm1441 = vcmask 64512
      %v1442 = vsel %vm1441, %v1439, %v1417
      %v1443 = vsel %vm1441, %v1440, %v1419
      %vm1444 = vcmask 97280
      %v1445 = vsel %vm1444, %v1442, %v1425
      %v1446 = vsel %vm1444, %v1443, %v1427
      %v1447 = vsel %vm1055, %v1445, %v1433
      %v1448 = vsel %vm1055, %v1446, %v1435
      %v1449 = vld [vmem:[%s8] sm:$0xff]
      %v1450 = vld [vmem:[%s8 + $0x8] sm:$0xff]
      %v1451 = vld [vmem:[%s8 + $0x10] sm:$0xf]
      %v1452 = vld [vmem:[%s9] sm:$0x1]
      %v1454 = vlaneseq
      %v1455 = vshrl.u32 %v1454, 7
      %v1456 = vsub.s32 0, %v1455
      %v1457 = vrot.slane %v1452, %v1456
      %vm1459 = vcmask 162816
      %v1461 = vsel %vm1459, %v1447, 0
      %v1464 = vsel %vm1459, %v1448, 0
      %vm1466 = vcmask 1043456
      %v1468 = vsel %vm1466, %v1451, 0
      %1470 = vmatprep.subr.mxu0 0.0
      %1471 = vmatpush1.msra.mxu0 %v1449
      %1472 = vmatprep.subr.mxu0 0.0
      %1473 = vmatpush1.msra.mxu0 %v1450
      %1474 = vmatprep.subr.mxu0 0.0
      %1475 = vmatpush1.msra.mxu0 %v1468
      %1476 = vmatprep.subr.mxu0 0.0
      %1477 = vmatpush1.msra.mxu0 0.0
      %1478 = vmatprep.subr.mxu0 0.0
      %1479 = vmatpush1.msra.mxu0 0.0
      %1480 = vmatprep.subr.mxu0 0.0
      %1481 = vmatpush1.msra.mxu0 0.0
      %1482 = vmatprep.subr.mxu0 0.0
      %1483 = vmatpush1.msra.mxu0 0.0
      %1484 = vmatprep.subr.mxu0 0.0
      %1485 = vmatpush1.msra.mxu0 0.0
      %1486 = vmatprep.subr.mxu0 0.0
      %1487 = vmatpush1.msra.mxu0 0.0
      %1488 = vmatprep.subr.mxu0 0.0
      %1489 = vmatpush1.msra.mxu0 0.0
      %1490 = vmatprep.subr.mxu0 0.0
      %1491 = vmatpush1.msra.mxu0 0.0
      %1492 = vmatprep.subr.mxu0 0.0
      %1493 = vmatpush1.msra.mxu0 0.0
      %1494 = vmatprep.subr.mxu0 0.0
      %1495 = vmatpush1.msra.mxu0 0.0
      %1496 = vmatprep.subr.mxu0 0.0
      %1497 = vmatpush1.msra.mxu0 0.0
      %1498 = vmatprep.subr.mxu0 0.0
      %1499 = vmatpush1.msra.mxu0 0.0
      %1500 = vmatprep.subr.mxu0 0.0
      %1501 = vmatpush1.msra.mxu0 0.0
      %1502 = vmatprep.subr.mxu0 0.0
      %1503 = vmatpush1.msra.mxu0 0.0
      %1504 = vmatprep.subr.mxu0 0.0
      %1505 = vmatpush1.msra.mxu0 0.0
      %1506 = vmatprep.subr.mxu0 0.0
      %1507 = vmatpush1.msra.mxu0 0.0
      %1508 = vmatprep.subr.mxu0 0.0
      %1509 = vmatpush1.msra.mxu0 0.0
      %1510 = vmatprep.subr.mxu0 0.0
      %1511 = vmatpush1.msra.mxu0 0.0
      %1512 = vmatprep.subr.mxu0 0.0
      %1513 = vmatpush1.msra.mxu0 0.0
      %1514 = vmatprep.subr.mxu0 0.0
      %1515 = vmatpush1.msra.mxu0 0.0
      %1516 = vmatprep.subr.mxu0 0.0
      %1517 = vmatpush1.msra.mxu0 0.0
      %1518 = vmatprep.subr.mxu0 0.0
      %1519 = vmatpush1.msra.mxu0 0.0
      %1520 = vmatprep.subr.mxu0 0.0
      %1521 = vmatpush1.msra.mxu0 0.0
      %1522 = vmatprep.subr.mxu0 0.0
      %1523 = vmatpush1.msra.mxu0 0.0
      %1524 = vmatprep.subr.mxu0 0.0
      %1525 = vmatpush1.msra.mxu0 0.0
      %1526 = vmatprep.subr.mxu0 0.0
      %1527 = vmatpush1.msra.mxu0 0.0
      %1528 = vmatprep.subr.mxu0 0.0
      %1529 = vmatpush1.msra.mxu0 0.0
      %1530 = vmatprep.subr.mxu0 0.0
      %1531 = vmatpush1.msra.mxu0 0.0
      %1532 = vmatprep.subr.mxu0 0.0
      %1533 = vmatpush1.msra.mxu0 0.0
      %1534 = vmatprep.mubr.f32.mxu0 0.0
      %1535 = vmatmul.mubr.f32.gmra.mrb[0].mxu0 %v1461
      %v1536 = vpop.f32.mrb[0].mxu0
      %v1537 = vadd.f32 %v1457, %v1536
      %v1538 = vpop.f32.mrb[0].mxu0
      %1539 = vmatprep.mubr.f32.mxu0 0.0
      %1540 = vmatmul.mubr.f32.gmra.mrb[0].mxu0 %v1464
      %v1541 = vpop.f32.mrb[0].mxu0
      %v1542 = vadd.f32 %v1457, %v1541
      %v1543 = vpop.f32.mrb[0].mxu0
      %1544 = vdwg.mxu0
      %v1545 = vmax.f32 %v1537, 0.0
      %v1546 = vmax.f32 %v1542, 0.0
      %v1547 = vmul.f32 %v1046, %v1545
      %v1548 = vmul.f32 %v1051, %v1546
      %1549 = vmatprep.subr.mxu0 0.0
      %1550 = vmatpush1.msra.mxu0 %v1545
      %1551 = vmatprep.subr.mxu0 0.0
      %1552 = vmatpush1.msra.mxu0 %v1546
      %1553 = vmatprep.subr.mxu0 0.0
      %1554 = vmatpush1.msra.mxu0 0.0
      %1555 = vmatprep.subr.mxu0 0.0
      %1556 = vmatpush1.msra.mxu0 0.0
      %1557 = vmatprep.subr.mxu0 0.0
      %1558 = vmatpush1.msra.mxu0 0.0
      %1559 = vmatprep.subr.mxu0 0.0
      %1560 = vmatpush1.msra.mxu0 0.0
      %1561 = vmatprep.subr.mxu0 0.0
      %1562 = vmatpush1.msra.mxu0 0.0
      %1563 = vmatprep.subr.mxu0 0.0
      %1564 = vmatpush1.msra.mxu0 0.0
      %1565 = vmatprep.subr.mxu0 0.0
      %1566 = vmatpush1.msra.mxu0 0.0
      %1567 = vmatprep.subr.mxu0 0.0
      %1568 = vmatpush1.msra.mxu0 0.0
      %1569 = vmatprep.subr.mxu0 0.0
      %1570 = vmatpush1.msra.mxu0 0.0
      %1571 = vmatprep.subr.mxu0 0.0
      %1572 = vmatpush1.msra.mxu0 0.0
      %1573 = vmatprep.subr.mxu0 0.0
      %1574 = vmatpush1.msra.mxu0 0.0
      %1575 = vmatprep.subr.mxu0 0.0
      %1576 = vmatpush1.msra.mxu0 0.0
      %1577 = vmatprep.subr.mxu0 0.0
      %1578 = vmatpush1.msra.mxu0 0.0
      %1579 = vmatprep.subr.mxu0 0.0
      %1580 = vmatpush1.msra.mxu0 0.0
      %1581 = vmatprep.subr.mxu0 0.0
      %1582 = vmatpush1.msra.mxu0 0.0
      %1583 = vmatprep.subr.mxu0 0.0
      %1584 = vmatpush1.msra.mxu0 0.0
      %1585 = vmatprep.subr.mxu0 0.0
      %1586 = vmatpush1.msra.mxu0 0.0
      %1587 = vmatprep.subr.mxu0 0.0
      %1588 = vmatpush1.msra.mxu0 0.0
      %1589 = vmatprep.subr.mxu0 0.0
      %1590 = vmatpush1.msra.mxu0 0.0
      %1591 = vmatprep.subr.mxu0 0.0
      %1592 = vmatpush1.msra.mxu0 0.0
      %1593 = vmatprep.subr.mxu0 0.0
      %1594 = vmatpush1.msra.mxu0 0.0
      %1595 = vmatprep.subr.mxu0 0.0
      %1596 = vmatpush1.msra.mxu0 0.0
      %1597 = vmatprep.subr.mxu0 0.0
      %1598 = vmatpush1.msra.mxu0 0.0
      %1599 = vmatprep.subr.mxu0 0.0
      %1600 = vmatpush1.msra.mxu0 0.0
      %1601 = vmatprep.subr.mxu0 0.0
      %1602 = vmatpush1.msra.mxu0 0.0
      %1603 = vmatprep.subr.mxu0 0.0
      %1604 = vmatpush1.msra.mxu0 0.0
      %1605 = vmatprep.subr.mxu0 0.0
      %1606 = vmatpush1.msra.mxu0 0.0
      %1607 = vmatprep.subr.mxu0 0.0
      %1608 = vmatpush1.msra.mxu0 0.0
      %1609 = vmatprep.subr.mxu0 0.0
      %1610 = vmatpush1.msra.mxu0 0.0
      %1611 = vmatprep.subr.mxu0 0.0
      %1612 = vmatpush1.msra.mxu0 0.0
      %1613 = vmatprep.mubr.f32.mxu0 0.0
      %1614 = vmatmul.mubr.f32.gmra.mrb[0].mxu0 %v1057
      %v1615 = vpop.f32.mrb[0].mxu0
      %v1616 = vadd.f32 0.0, %v1615
      %v1617 = vpop.f32.mrb[0].mxu0
      %1618 = vmatprep.mubr.f32.mxu0 0.0
      %1619 = vmatmul.mubr.f32.gmra.mrb[0].mxu0 %v1060
      %v1620 = vpop.f32.mrb[0].mxu0
      %v1621 = vadd.f32 0.0, %v1620
      %v1622 = vpop.f32.mrb[0].mxu0
      %1623 = vdwg.mxu0
      %v1624 = vsub.f32 %v1547, %v1616
      %v1625 = vsub.f32 %v1548, %v1621
      %v1626 = vsub.f32 %v1624, %v1545
      %v1627 = vsub.f32 %v1625, %v1546
      %v1628 = vmul.f32 %v1143, %v1545
      %v1629 = vmul.f32 %v1147, %v1546
      %1630 = vmatprep.subr.mxu0 0.0
      %1631 = vmatpush1.msra.mxu0 %v1545
      %1632 = vmatprep.subr.mxu0 0.0
      %1633 = vmatpush1.msra.mxu0 %v1546
      %1634 = vmatprep.subr.mxu0 0.0
      %1635 = vmatpush1.msra.mxu0 0.0
      %1636 = vmatprep.subr.mxu0 0.0
      %1637 = vmatpush1.msra.mxu0 0.0
      %1638 = vmatprep.subr.mxu0 0.0
      %1639 = vmatpush1.msra.mxu0 0.0
      %1640 = vmatprep.subr.mxu0 0.0
      %1641 = vmatpush1.msra.mxu0 0.0
      %1642 = vmatprep.subr.mxu0 0.0
      %1643 = vmatpush1.msra.mxu0 0.0
      %1644 = vmatprep.subr.mxu0 0.0
      %1645 = vmatpush1.msra.mxu0 0.0
      %1646 = vmatprep.subr.mxu0 0.0
      %1647 = vmatpush1.msra.mxu0 0.0
      %1648 = vmatprep.subr.mxu0 0.0
      %1649 = vmatpush1.msra.mxu0 0.0
      %1650 = vmatprep.subr.mxu0 0.0
      %1651 = vmatpush1.msra.mxu0 0.0
      %1652 = vmatprep.subr.mxu0 0.0
      %1653 = vmatpush1.msra.mxu0 0.0
      %1654 = vmatprep.subr.mxu0 0.0
      %1655 = vmatpush1.msra.mxu0 0.0
      %1656 = vmatprep.subr.mxu0 0.0
      %1657 = vmatpush1.msra.mxu0 0.0
      %1658 = vmatprep.subr.mxu0 0.0
      %1659 = vmatpush1.msra.mxu0 0.0
      %1660 = vmatprep.subr.mxu0 0.0
      %1661 = vmatpush1.msra.mxu0 0.0
      %1662 = vmatprep.subr.mxu0 0.0
      %1663 = vmatpush1.msra.mxu0 0.0
      %1664 = vmatprep.subr.mxu0 0.0
      %1665 = vmatpush1.msra.mxu0 0.0
      %1666 = vmatprep.subr.mxu0 0.0
      %1667 = vmatpush1.msra.mxu0 0.0
      %1668 = vmatprep.subr.mxu0 0.0
      %1669 = vmatpush1.msra.mxu0 0.0
      %1670 = vmatprep.subr.mxu0 0.0
      %1671 = vmatpush1.msra.mxu0 0.0
      %1672 = vmatprep.subr.mxu0 0.0
      %1673 = vmatpush1.msra.mxu0 0.0
      %1674 = vmatprep.subr.mxu0 0.0
      %1675 = vmatpush1.msra.mxu0 0.0
      %1676 = vmatprep.subr.mxu0 0.0
      %1677 = vmatpush1.msra.mxu0 0.0
      %1678 = vmatprep.subr.mxu0 0.0
      %1679 = vmatpush1.msra.mxu0 0.0
      %1680 = vmatprep.subr.mxu0 0.0
      %1681 = vmatpush1.msra.mxu0 0.0
      %1682 = vmatprep.subr.mxu0 0.0
      %1683 = vmatpush1.msra.mxu0 0.0
      %1684 = vmatprep.subr.mxu0 0.0
      %1685 = vmatpush1.msra.mxu0 0.0
      %1686 = vmatprep.subr.mxu0 0.0
      %1687 = vmatpush1.msra.mxu0 0.0
      %1688 = vmatprep.subr.mxu0 0.0
      %1689 = vmatpush1.msra.mxu0 0.0
      %1690 = vmatprep.subr.mxu0 0.0
      %1691 = vmatpush1.msra.mxu0 0.0
      %1692 = vmatprep.subr.mxu0 0.0
      %1693 = vmatpush1.msra.mxu0 0.0
      %1694 = vmatprep.mubr.f32.mxu0 0.0
      %1695 = vmatmul.mubr.f32.gmra.mrb[0].mxu0 %v1152
      %v1696 = vpop.f32.mrb[0].mxu0
      %v1697 = vadd.f32 0.0, %v1696
      %v1698 = vpop.f32.mrb[0].mxu0
      %1699 = vmatprep.mubr.f32.mxu0 0.0
      %1700 = vmatmul.mubr.f32.gmra.mrb[0].mxu0 %v1155
      %v1701 = vpop.f32.mrb[0].mxu0
      %v1702 = vadd.f32 0.0, %v1701
      %v1703 = vpop.f32.mrb[0].mxu0
      %1704 = vdwg.mxu0
      %v1705 = vsub.f32 %v1628, %v1697
      %v1706 = vsub.f32 %v1629, %v1702
      %v1707 = vsub.f32 %v1705, %v1545
      %v1708 = vsub.f32 %v1706, %v1546
      %v1709 = vmul.f32 %v1046, %v1626
      %v1710 = vmul.f32 %v1051, %v1627
      %1711 = vmatprep.subr.mxu0 0.0
      %1712 = vmatpush1.msra.mxu0 %v1626
      %1713 = vmatprep.subr.mxu0 0.0
      %1714 = vmatpush1.msra.mxu0 %v1627
      %1715 = vmatprep.subr.mxu0 0.0
      %1716 = vmatpush1.msra.mxu0 0.0
      %1717 = vmatprep.subr.mxu0 0.0
      %1718 = vmatpush1.msra.mxu0 0.0
      %1719 = vmatprep.subr.mxu0 0.0
      %1720 = vmatpush1.msra.mxu0 0.0
      %1721 = vmatprep.subr.mxu0 0.0
      %1722 = vmatpush1.msra.mxu0 0.0
      %1723 = vmatprep.subr.mxu0 0.0
      %1724 = vmatpush1.msra.mxu0 0.0
      %1725 = vmatprep.subr.mxu0 0.0
      %1726 = vmatpush1.msra.mxu0 0.0
      %1727 = vmatprep.subr.mxu0 0.0
      %1728 = vmatpush1.msra.mxu0 0.0
      %1729 = vmatprep.subr.mxu0 0.0
      %1730 = vmatpush1.msra.mxu0 0.0
      %1731 = vmatprep.subr.mxu0 0.0
      %1732 = vmatpush1.msra.mxu0 0.0
      %1733 = vmatprep.subr.mxu0 0.0
      %1734 = vmatpush1.msra.mxu0 0.0
      %1735 = vmatprep.subr.mxu0 0.0
      %1736 = vmatpush1.msra.mxu0 0.0
      %1737 = vmatprep.subr.mxu0 0.0
      %1738 = vmatpush1.msra.mxu0 0.0
      %1739 = vmatprep.subr.mxu0 0.0
      %1740 = vmatpush1.msra.mxu0 0.0
      %1741 = vmatprep.subr.mxu0 0.0
      %1742 = vmatpush1.msra.mxu0 0.0
      %1743 = vmatprep.subr.mxu0 0.0
      %1744 = vmatpush1.msra.mxu0 0.0
      %1745 = vmatprep.subr.mxu0 0.0
      %1746 = vmatpush1.msra.mxu0 0.0
      %1747 = vmatprep.subr.mxu0 0.0
      %1748 = vmatpush1.msra.mxu0 0.0
      %1749 = vmatprep.subr.mxu0 0.0
      %1750 = vmatpush1.msra.mxu0 0.0
      %1751 = vmatprep.subr.mxu0 0.0
      %1752 = vmatpush1.msra.mxu0 0.0
      %1753 = vmatprep.subr.mxu0 0.0
      %1754 = vmatpush1.msra.mxu0 0.0
      %1755 = vmatprep.subr.mxu0 0.0
      %1756 = vmatpush1.msra.mxu0 0.0
      %1757 = vmatprep.subr.mxu0 0.0
      %1758 = vmatpush1.msra.mxu0 0.0
      %1759 = vmatprep.subr.mxu0 0.0
      %1760 = vmatpush1.msra.mxu0 0.0
      %1761 = vmatprep.subr.mxu0 0.0
      %1762 = vmatpush1.msra.mxu0 0.0
      %1763 = vmatprep.subr.mxu0 0.0
      %1764 = vmatpush1.msra.mxu0 0.0
      %1765 = vmatprep.subr.mxu0 0.0
      %1766 = vmatpush1.msra.mxu0 0.0
      %1767 = vmatprep.subr.mxu0 0.0
      %1768 = vmatpush1.msra.mxu0 0.0
      %1769 = vmatprep.subr.mxu0 0.0
      %1770 = vmatpush1.msra.mxu0 0.0
      %1771 = vmatprep.subr.mxu0 0.0
      %1772 = vmatpush1.msra.mxu0 0.0
      %1773 = vmatprep.subr.mxu0 0.0
      %1774 = vmatpush1.msra.mxu0 0.0
      %1775 = vmatprep.mubr.f32.mxu0 0.0
      %1776 = vmatmul.mubr.f32.gmra.mrb[0].mxu0 %v1057
      %v1777 = vpop.f32.mrb[0].mxu0
      %v1778 = vadd.f32 0.0, %v1777
      %v1779 = vpop.f32.mrb[0].mxu0
      %1780 = vmatprep.mubr.f32.mxu0 0.0
      %1781 = vmatmul.mubr.f32.gmra.mrb[0].mxu0 %v1060
      %v1782 = vpop.f32.mrb[0].mxu0
      %v1783 = vadd.f32 0.0, %v1782
      %v1784 = vpop.f32.mrb[0].mxu0
      %1785 = vdwg.mxu0
      %v1786 = vsub.f32 %v1709, %v1778
      %v1787 = vsub.f32 %v1710, %v1783
      %v1788 = vsub.f32 %v1786, %v1626
      %v1789 = vsub.f32 %v1787, %v1627
      %v1790 = vmul.f32 %v1788, 2.0
      %v1791 = vmul.f32 %v1789, 2.0
      %v1792 = vsub.f32 %v1790, %v1545
      %v1793 = vsub.f32 %v1791, %v1546
      %v1794 = vmul.f32 %v1143, %v1707
      %v1795 = vmul.f32 %v1147, %v1708
      %1796 = vmatprep.subr.mxu0 0.0
      %1797 = vmatpush1.msra.mxu0 %v1707
      %1798 = vmatprep.subr.mxu0 0.0
      %1799 = vmatpush1.msra.mxu0 %v1708
      %1800 = vmatprep.subr.mxu0 0.0
      %1801 = vmatpush1.msra.mxu0 0.0
      %1802 = vmatprep.subr.mxu0 0.0
      %1803 = vmatpush1.msra.mxu0 0.0
      %1804 = vmatprep.subr.mxu0 0.0
      %1805 = vmatpush1.msra.mxu0 0.0
      %1806 = vmatprep.subr.mxu0 0.0
      %1807 = vmatpush1.msra.mxu0 0.0
      %1808 = vmatprep.subr.mxu0 0.0
      %1809 = vmatpush1.msra.mxu0 0.0
      %1810 = vmatprep.subr.mxu0 0.0
      %1811 = vmatpush1.msra.mxu0 0.0
      %1812 = vmatprep.subr.mxu0 0.0
      %1813 = vmatpush1.msra.mxu0 0.0
      %1814 = vmatprep.subr.mxu0 0.0
      %1815 = vmatpush1.msra.mxu0 0.0
      %1816 = vmatprep.subr.mxu0 0.0
      %1817 = vmatpush1.msra.mxu0 0.0
      %1818 = vmatprep.subr.mxu0 0.0
      %1819 = vmatpush1.msra.mxu0 0.0
      %1820 = vmatprep.subr.mxu0 0.0
      %1821 = vmatpush1.msra.mxu0 0.0
      %1822 = vmatprep.subr.mxu0 0.0
      %1823 = vmatpush1.msra.mxu0 0.0
      %1824 = vmatprep.subr.mxu0 0.0
      %1825 = vmatpush1.msra.mxu0 0.0
      %1826 = vmatprep.subr.mxu0 0.0
      %1827 = vmatpush1.msra.mxu0 0.0
      %1828 = vmatprep.subr.mxu0 0.0
      %1829 = vmatpush1.msra.mxu0 0.0
      %1830 = vmatprep.subr.mxu0 0.0
      %1831 = vmatpush1.msra.mxu0 0.0
      %1832 = vmatprep.subr.mxu0 0.0
      %1833 = vmatpush1.msra.mxu0 0.0
      %1834 = vmatprep.subr.mxu0 0.0
      %1835 = vmatpush1.msra.mxu0 0.0
      %1836 = vmatprep.subr.mxu0 0.0
      %1837 = vmatpush1.msra.mxu0 0.0
      %1838 = vmatprep.subr.mxu0 0.0
      %1839 = vmatpush1.msra.mxu0 0.0
      %1840 = vmatprep.subr.mxu0 0.0
      %1841 = vmatpush1.msra.mxu0 0.0
      %1842 = vmatprep.subr.mxu0 0.0
      %1843 = vmatpush1.msra.mxu0 0.0
      %1844 = vmatprep.subr.mxu0 0.0
      %1845 = vmatpush1.msra.mxu0 0.0
      %1846 = vmatprep.subr.mxu0 0.0
      %1847 = vmatpush1.msra.mxu0 0.0
      %1848 = vmatprep.subr.mxu0 0.0
      %1849 = vmatpush1.msra.mxu0 0.0
      %1850 = vmatprep.subr.mxu0 0.0
      %1851 = vmatpush1.msra.mxu0 0.0
      %1852 = vmatprep.subr.mxu0 0.0
      %1853 = vmatpush1.msra.mxu0 0.0
      %1854 = vmatprep.subr.mxu0 0.0
      %1855 = vmatpush1.msra.mxu0 0.0
      %1856 = vmatprep.subr.mxu0 0.0
      %1857 = vmatpush1.msra.mxu0 0.0
      %1858 = vmatprep.subr.mxu0 0.0
      %1859 = vmatpush1.msra.mxu0 0.0
      %1860 = vmatprep.mubr.f32.mxu0 0.0
      %1861 = vmatmul.mubr.f32.gmra.mrb[0].mxu0 %v1152
      %v1862 = vpop.f32.mrb[0].mxu0
      %v1863 = vadd.f32 0.0, %v1862
      %v1864 = vpop.f32.mrb[0].mxu0
      %1865 = vmatprep.mubr.f32.mxu0 0.0
      %1866 = vmatmul.mubr.f32.gmra.mrb[0].mxu0 %v1155
      %v1867 = vpop.f32.mrb[0].mxu0
      %v1868 = vadd.f32 0.0, %v1867
      %v1869 = vpop.f32.mrb[0].mxu0
      %1870 = vdwg.mxu0
      %v1871 = vsub.f32 %v1794, %v1863
      %v1872 = vsub.f32 %v1795, %v1868
      %v1873 = vsub.f32 %v1871, %v1707
      %v1874 = vsub.f32 %v1872, %v1708
      %v1875 = vmul.f32 %v1873, 2.0
      %v1876 = vmul.f32 %v1874, 2.0
      %v1877 = vsub.f32 %v1875, %v1545
      %v1878 = vsub.f32 %v1876, %v1546
      %1881 = vrot.lane.b32.xlu0 %v1626, 32
      %v1882 = vpop.permute.xlu0 %1881
      %1883 = vrot.lane.b32.xlu0 %v1627, 32
      %v1884 = vpop.permute.xlu0 %1883
      %1889 = vrot.lane.b32.xlu0 %v1707, 64
      %v1890 = vpop.permute.xlu0 %1889
      %1891 = vrot.lane.b32.xlu0 %v1708, 64
      %v1892 = vpop.permute.xlu0 %1891
      %1897 = vrot.lane.b32.xlu0 %v1792, 96
      %v1898 = vpop.permute.xlu0 %1897
      %1899 = vrot.lane.b32.xlu0 %v1793, 96
      %v1900 = vpop.permute.xlu0 %1899
      %v1903 = vsel %vm593, %v1545, %v1882
      %v1904 = vsel %vm593, %v1546, %v1884
      %vm1905 = vcmask 523264
      %v1906 = vsel %vm1905, %v1903, %v1890
      %v1907 = vsel %vm1905, %v1904, %v1892
      %vm1908 = vcmask 785408
      %v1909 = vsel %vm1908, %v1906, %v1898
      %v1910 = vsel %vm1908, %v1907, %v1900
      %v1911 = vld [vmem:[%s10] sm:$0xff]
      %v1912 = vld [vmem:[%s10 + $0x8] sm:$0xff]
      %v1913 = vld [vmem:[%s10 + $0x10] sm:$0xff]
      %v1914 = vld [vmem:[%s10 + $0x18] sm:$0xff]
      %v1915 = vld [vmem:[%s10 + $0x20] sm:$0xff]
      %v1916 = vld [vmem:[%s10 + $0x28] sm:$0xff]
      %v1917 = vld [vmem:[%s10 + $0x30] sm:$0xff]
      %v1918 = vld [vmem:[%s10 + $0x38] sm:$0xff]
      %v1919 = vld [vmem:[%s10 + $0x40] sm:$0xff]
      %v1920 = vld [vmem:[%s10 + $0x48] sm:$0xff]
      %v1921 = vld [vmem:[%s10 + $0x50] sm:$0xff]
      %v1922 = vld [vmem:[%s10 + $0x58] sm:$0xff]
      %v1923 = vld [vmem:[%s10 + $0x60] sm:$0xff]
      %v1924 = vld [vmem:[%s10 + $0x68] sm:$0xff]
      %v1925 = vld [vmem:[%s10 + $0x70] sm:$0xff]
      %v1926 = vld [vmem:[%s10 + $0x78] sm:$0xff]
      %v1927 = vld [vmem:[%s10 + $0x80] sm:$0xff]
      %v1928 = vld [vmem:[%s10 + $0x88] sm:$0xff]
      %v1929 = vld [vmem:[%s10 + $0x90] sm:$0xff]
      %v1930 = vld [vmem:[%s10 + $0x98] sm:$0xff]
      %v1931 = vld [vmem:[%s11] sm:$0x1]
      %v1933 = vlaneseq
      %v1934 = vshrl.u32 %v1933, 7
      %v1935 = vsub.s32 0, %v1934
      %v1936 = vrot.slane %v1931, %v1935
      %v1939 = vsel %vm593, %v1877, 0
      %v1942 = vsel %vm593, %v1878, 0
      %1944 = vmatprep.subr.mxu0 0.0
      %1945 = vmatpush1.msra.mxu0 %v1911
      %1946 = vmatprep.subr.mxu0 0.0
      %1947 = vmatpush1.msra.mxu0 %v1912
      %1948 = vmatprep.subr.mxu0 0.0
      %1949 = vmatpush1.msra.mxu0 %v1913
      %1950 = vmatprep.subr.mxu0 0.0
      %1951 = vmatpush1.msra.mxu0 %v1914
      %1952 = vmatprep.subr.mxu0 0.0
      %1953 = vmatpush1.msra.mxu0 %v1915
      %1954 = vmatprep.subr.mxu0 0.0
      %1955 = vmatpush1.msra.mxu0 %v1916
      %1956 = vmatprep.subr.mxu0 0.0
      %1957 = vmatpush1.msra.mxu0 %v1917
      %1958 = vmatprep.subr.mxu0 0.0
      %1959 = vmatpush1.msra.mxu0 %v1918
      %1960 = vmatprep.subr.mxu0 0.0
      %1961 = vmatpush1.msra.mxu0 %v1919
      %1962 = vmatprep.subr.mxu0 0.0
      %1963 = vmatpush1.msra.mxu0 %v1920
      %1964 = vmatprep.subr.mxu0 0.0
      %1965 = vmatpush1.msra.mxu0 %v1921
      %1966 = vmatprep.subr.mxu0 0.0
      %1967 = vmatpush1.msra.mxu0 %v1922
      %1968 = vmatprep.subr.mxu0 0.0
      %1969 = vmatpush1.msra.mxu0 %v1923
      %1970 = vmatprep.subr.mxu0 0.0
      %1971 = vmatpush1.msra.mxu0 %v1924
      %1972 = vmatprep.subr.mxu0 0.0
      %1973 = vmatpush1.msra.mxu0 %v1925
      %1974 = vmatprep.subr.mxu0 0.0
      %1975 = vmatpush1.msra.mxu0 %v1926
      %1976 = vmatprep.subr.mxu0 0.0
      %1977 = vmatpush1.msra.mxu0 %v1927
      %1978 = vmatprep.subr.mxu0 0.0
      %1979 = vmatpush1.msra.mxu0 %v1928
      %1980 = vmatprep.subr.mxu0 0.0
      %1981 = vmatpush1.msra.mxu0 %v1929
      %1982 = vmatprep.subr.mxu0 0.0
      %1983 = vmatpush1.msra.mxu0 %v1930
      %1984 = vmatprep.subr.mxu0 0.0
      %1985 = vmatpush1.msra.mxu0 0.0
      %1986 = vmatprep.subr.mxu0 0.0
      %1987 = vmatpush1.msra.mxu0 0.0
      %1988 = vmatprep.subr.mxu0 0.0
      %1989 = vmatpush1.msra.mxu0 0.0
      %1990 = vmatprep.subr.mxu0 0.0
      %1991 = vmatpush1.msra.mxu0 0.0
      %1992 = vmatprep.subr.mxu0 0.0
      %1993 = vmatpush1.msra.mxu0 0.0
      %1994 = vmatprep.subr.mxu0 0.0
      %1995 = vmatpush1.msra.mxu0 0.0
      %1996 = vmatprep.subr.mxu0 0.0
      %1997 = vmatpush1.msra.mxu0 0.0
      %1998 = vmatprep.subr.mxu0 0.0
      %1999 = vmatpush1.msra.mxu0 0.0
      %2000 = vmatprep.subr.mxu0 0.0
      %2001 = vmatpush1.msra.mxu0 0.0
      %2002 = vmatprep.subr.mxu0 0.0
      %2003 = vmatpush1.msra.mxu0 0.0
      %2004 = vmatprep.subr.mxu0 0.0
      %2005 = vmatpush1.msra.mxu0 0.0
      %2006 = vmatprep.subr.mxu0 0.0
      %2007 = vmatpush1.msra.mxu0 0.0
      %2008 = vmatprep.mubr.f32.mxu0 %v1939
      %2009 = vmatmul.mubr.f32.gmra.mrb[0].mxu0 %v1909
      %v2010 = vpop.f32.mrb[0].mxu0
      %v2011 = vadd.f32 %v1936, %v2010
      %v2012 = vpop.f32.mrb[0].mxu0
      %2013 = vmatprep.mubr.f32.mxu0 %v1942
      %2014 = vmatmul.mubr.f32.gmra.mrb[0].mxu0 %v1910
      %v2015 = vpop.f32.mrb[0].mxu0
      %v2016 = vadd.f32 %v1936, %v2015
      %v2017 = vpop.f32.mrb[0].mxu0
      %2018 = vdwg.mxu0
      %vm2019 = vcmask 23552
      %2020 = vst.msk [vmem:[%s470] sm:$0xff] %vm2019, %v2011
      %2021 = vst.msk [vmem:[%s470 + $0x8] sm:$0xff] %vm2019, %v2016
      %p2022 = scmp.lt.s32.totalorder %s23, 7
      %s2023 = scalar_select %p2022, %s23, 7
      %s2024 = smul.addr %s2023, 2
      %s2025 = smul.addr %s2024, 8
      %s2026 = scalar_lea.vmem %s12, %s2025
      // Predicated region
      $region69: #{multi_conv_net_forward.1} parent=67 // pred_check
        %p2027 = pneg %p313
      $region70: #{multi_conv_net_forward.1} parent=67 // pred_check_branch
        %2029 = sbr.rel (%p2027) target = $region72
      $region71: #{multi_conv_net_forward.1} parent=67 // pred_region
        _
      $region72: #{multi_conv_net_forward.1} parent=67 // pred_fallthru
        _
    $region68: #{multi_conv_net_forward.1} parent=5 // pred_fallthru
      _
    %p2030 = scmp.le.s32.totalorder 2, %s18
    // Predicated region
    $region73: #{multi_conv_net_forward.1} parent=5 // pred_check
      %p2031 = pneg %p2030
    $region74: #{multi_conv_net_forward.1} parent=5 // pred_check_branch
      %2033 = sbr.rel (%p2031) target = $region76
    $region75: #{multi_conv_net_forward.1} parent=5 // pred_region
      %s2034 = ssub.s32 %s18, 2
      // Predicated region
      $region77: #{multi_conv_net_forward.1} parent=75 // pred_check
        %p2035 = pneg %p319
      $region78: #{multi_conv_net_forward.1} parent=75 // pred_check_branch
        %2037 = sbr.rel (%p2035) target = $region80
      $region79: #{multi_conv_net_forward.1} parent=75 // pred_region
        %p2038 = scmp.lt.s32.totalorder %s24, 7
        %s2039 = scalar_select %p2038, %s24, 7
        %s2040 = smul.addr %s2039, 2
        %s2041 = smul.addr %s2040, 8
        %s2042 = scalar_lea.vmem %s12, %s2041
      $region80: #{multi_conv_net_forward.1} parent=75 // pred_fallthru
        _
    $region76: #{multi_conv_net_forward.1} parent=5 // pred_fallthru
      _
  $region6: #{multi_conv_net_forward.1} parent=0 // loop_footer
    %s22 = sadd.s32 1, %s18
  $region7: #{multi_conv_net_forward.1} parent=0 // loop_footer_branch
    %17 = sbr.rel target = $region3
  $region8: #{multi_conv_net_forward.1} parent=0 // loop_exit
    _

</llo_original>
